<compile_context>
chip_gen: v6e
topology: v6e:2x2x1
jax: 0.10.0
libtpu: 0.0.40
codegen_flags: <defaults>
</compile_context>

<pallas_src>
import jax
import jax.numpy as jnp
from jax.experimental import pallas as pl
from jax.experimental.pallas import tpu as pltpu

EMBED_DIM = 128   # embedding_dim == conv channels == 128 (matches the module)
VOCAB = 23
VOCAB_PAD = 128   # pad the tiny table so the gather-matmul K is lane-aligned
SEQ_LEN = 16      # small seq for the demo (module default 512 also works)
BATCH = 12        # padded to a multiple of B_TILE inside the wrapper
B_TILE = 8        # sequences per grid step -> M = B_TILE * L = 128 sublanes


def _make_kernel(b_tile, seq_len, c, vocab_pad):
    m = b_tile * seq_len  # rows per tile (packed sequences)

    def kernel(ids_ref, emb_ref, w1_ref, b1_ref, w2_ref, b2_ref, w3_ref,
               b3_ref, o_ref):
        # ---- embedding gather: one-hot (M, Vpad) @ (Vpad, C) on the MXU ----
        ids = ids_ref[...]                                       # (M, 1) int32
        vocab_iota = jax.lax.broadcasted_iota(jnp.int32, (m, vocab_pad), 1)
        onehot = jnp.where(vocab_iota == ids, 1.0, 0.0).astype(jnp.bfloat16)
        x = jnp.dot(onehot, emb_ref[...],
                    preferred_element_type=jnp.float32)          # (M, C) f32

        # Per-sequence boundary masks (hoisted; computed once per grid step).
        row = jax.lax.broadcasted_iota(jnp.int32, (m, c), 0)
        pos = row % seq_len
        is_first = pos == 0                # first row of each packed sequence
        is_last = pos == seq_len - 1       # last row of each packed sequence

        def conv3_relu(h, w_ref, b_ref):
            # Build the k=3 shifted/concatenated input (M, 3C), zeroing the
            # taps at per-sequence boundaries, then one MXU matmul (K = 3C).
            h_prev = jnp.where(is_first, 0.0,
                               pltpu.roll(h, shift=1, axis=0))        # h[t-1]
            h_next = jnp.where(is_last, 0.0,
                               pltpu.roll(h, shift=m - 1, axis=0))    # h[t+1]
            x3 = jnp.concatenate([h_prev, h, h_next],
                                 axis=1).astype(jnp.bfloat16)         # (M, 3C)
            y = jnp.dot(x3, w_ref[...],
                        preferred_element_type=jnp.float32) + b_ref[...]
            return jnp.maximum(y, 0.0)                                # f32

        h = conv3_relu(x, w1_ref, b1_ref)
        h = conv3_relu(h, w2_ref, b2_ref)
        h = conv3_relu(h, w3_ref, b3_ref)

        # AdaptiveMaxPool1d(1): per-sequence max over L, one dense (8,128) store.
        o_ref[...] = jnp.max(h.reshape(b_tile, seq_len, c), axis=1)

    return kernel


def cnn_encoder_forward(seq, params, *, b_tile=B_TILE):
    """seq: int32 (B, L).  Returns float32 (B, 128)."""
    emb = params["embed"]                       # (VOCAB, C) f32
    c = emb.shape[1]
    b, l = seq.shape

    # ---- host-side parameter prep (layout glue, not the hot path) ----
    emb_pad = jnp.zeros((VOCAB_PAD, c), jnp.float32).at[:emb.shape[0]].set(emb)
    emb_pad = emb_pad.astype(jnp.bfloat16)

    def conv_args(name):
        w = params[name + "_w"]                 # (Cout, Cin, 3) PyTorch layout
        bias = params[name + "_b"]              # (Cout,)
        # (3*Cin, Cout) = [tap0 ; tap1 ; tap2], matching x3 = [x[t-1]|x[t]|x[t+1]]
        w_cat = jnp.concatenate(
            [w[:, :, 0].T, w[:, :, 1].T, w[:, :, 2].T], axis=0)
        return w_cat.astype(jnp.bfloat16), bias.reshape(1, -1).astype(jnp.float32)

    w1, b1 = conv_args("conv1")
    w2, b2 = conv_args("conv2")
    w3, b3 = conv_args("conv3")

    # Pad the batch to a multiple of b_tile; padded rows are sliced off.
    b_pad = ((b + b_tile - 1) // b_tile) * b_tile
    seq_p = jnp.zeros((b_pad, l), jnp.int32).at[:b].set(seq.astype(jnp.int32))
    ids = seq_p.reshape(b_pad * l, 1)           # only int32 ids cross HBM

    m = b_tile * l
    kernel = _make_kernel(b_tile, l, c, VOCAB_PAD)

    out = pl.pallas_call(
        kernel,
        out_shape=jax.ShapeDtypeStruct((b_pad, c), jnp.float32),
        grid_spec=pltpu.PrefetchScalarGridSpec(
            num_scalar_prefetch=0,
            grid=(b_pad // b_tile,),            # >= 2 steps for v7x megacore
            in_specs=[
                pl.BlockSpec((m, 1), lambda i: (i, 0)),           # token ids
                pl.BlockSpec((VOCAB_PAD, c), lambda i: (0, 0)),   # embed table
                pl.BlockSpec((3 * c, c), lambda i: (0, 0)),       # w1 (3C, C)
                pl.BlockSpec((1, c), lambda i: (0, 0)),           # b1
                pl.BlockSpec((3 * c, c), lambda i: (0, 0)),       # w2
                pl.BlockSpec((1, c), lambda i: (0, 0)),           # b2
                pl.BlockSpec((3 * c, c), lambda i: (0, 0)),       # w3
                pl.BlockSpec((1, c), lambda i: (0, 0)),           # b3
            ],
            out_specs=pl.BlockSpec((b_tile, c), lambda i: (i, 0)),  # dense slab
        ),
        compiler_params=pltpu.CompilerParams(
            dimension_semantics=("parallel",)),
    )(ids, emb_pad, w1, b1, w2, b2, w3, b3)

    return out[:b]


def _reference_forward(seq, params):
    """Pure-JAX f32 reference (same math as the PyTorch module)."""
    x = jnp.take(params["embed"], seq, axis=0)          # (B, L, C)
    for name in ("conv1", "conv2", "conv3"):
        w = params[name + "_w"]                          # (Cout, Cin, 3)
        b = params[name + "_b"]
        xp = jnp.pad(x, ((0, 0), (1, 1), (0, 0)))        # pad seq axis
        y = (jnp.einsum("blc,oc->blo", xp[:, 0:-2], w[:, :, 0]) +
             jnp.einsum("blc,oc->blo", xp[:, 1:-1], w[:, :, 1]) +
             jnp.einsum("blc,oc->blo", xp[:, 2:], w[:, :, 2]) + b)
        x = jnp.maximum(y, 0.0)
    return jnp.max(x, axis=1)                            # (B, Cout)


def _init_params(key):
    ks = jax.random.split(key, 7)
    p = {}
    p["embed"] = jax.random.normal(ks[0], (VOCAB, EMBED_DIM), jnp.float32) * 0.1
    for i, name in enumerate(("conv1", "conv2", "conv3")):
        p[name + "_w"] = jax.random.normal(
            ks[1 + 2 * i], (EMBED_DIM, EMBED_DIM, 3), jnp.float32) * 0.05
        p[name + "_b"] = jax.random.normal(
            ks[2 + 2 * i], (EMBED_DIM,), jnp.float32) * 0.05
    return p


if __name__ == "__main__":
    key = jax.random.PRNGKey(0)
    params = _init_params(key)
    seq = jax.random.randint(jax.random.fold_in(key, 123), (BATCH, SEQ_LEN),
                             0, VOCAB, dtype=jnp.int32)

    out = jax.block_until_ready(cnn_encoder_forward(seq, params))
    ref = _reference_forward(seq, params)

    assert out.shape == (BATCH, EMBED_DIM), out.shape
    max_err = float(jnp.max(jnp.abs(out - ref)))
    # bf16 MXU operands (f32 accumulation) vs. the pure-f32 reference.
    assert jnp.allclose(out, ref, rtol=2e-2, atol=2e-2), max_err

    print("KERNEL_OK")
</pallas_src>

<mosaic_0001>
module attributes {stable_mosaic.version = 11 : i64} {
  func.func @kernel(%arg0: i32, %arg1: memref<128x1xi32, #tpu.memory_space<vmem>>, %arg2: memref<128x128xbf16, #tpu.memory_space<vmem>>, %arg3: memref<384x128xbf16, #tpu.memory_space<vmem>>, %arg4: memref<1x128xf32, #tpu.memory_space<vmem>>, %arg5: memref<384x128xbf16, #tpu.memory_space<vmem>>, %arg6: memref<1x128xf32, #tpu.memory_space<vmem>>, %arg7: memref<384x128xbf16, #tpu.memory_space<vmem>>, %arg8: memref<1x128xf32, #tpu.memory_space<vmem>>, %arg9: memref<8x128xf32, #tpu.memory_space<vmem>>) attributes {dimension_semantics = [#tpu.dimension_semantics<parallel>], iteration_bounds = array<i64: 2>, scalar_prefetch = 0 : i64, scratch_operands = 0 : i64, tpu.core_type = #tpu.core_type<tc>, window_params = [{transform_indices = @transform_0, window_bounds = array<i64: 128, 1>}, {pipeline_mode = #tpu.pipeline_mode<synchronous>, transform_indices = @transform_1, window_bounds = array<i64: 128, 128>}, {pipeline_mode = #tpu.pipeline_mode<synchronous>, transform_indices = @transform_2, window_bounds = array<i64: 384, 128>}, {pipeline_mode = #tpu.pipeline_mode<synchronous>, transform_indices = @transform_3, window_bounds = array<i64: 1, 128>}, {pipeline_mode = #tpu.pipeline_mode<synchronous>, transform_indices = @transform_4, window_bounds = array<i64: 384, 128>}, {pipeline_mode = #tpu.pipeline_mode<synchronous>, transform_indices = @transform_5, window_bounds = array<i64: 1, 128>}, {pipeline_mode = #tpu.pipeline_mode<synchronous>, transform_indices = @transform_6, window_bounds = array<i64: 384, 128>}, {pipeline_mode = #tpu.pipeline_mode<synchronous>, transform_indices = @transform_7, window_bounds = array<i64: 1, 128>}, {transform_indices = @transform_8, window_bounds = array<i64: 8, 128>}]} {
    %c0 = arith.constant 0 : index
    %c0_0 = arith.constant 0 : index
    %0 = vector.load %arg1[%c0, %c0_0] : memref<128x1xi32, #tpu.memory_space<vmem>>, vector<128x1xi32>
    %1 = tpu.iota {dimensions = array<i32: 1>} : vector<128x128xi32>
    %2 = vector.broadcast %0 : vector<128x1xi32> to vector<128x128xi32>
    %3 = arith.cmpi eq, %1, %2 : vector<128x128xi32>
    %cst = arith.constant 1.000000e+00 : f32
    %cst_1 = arith.constant 0.000000e+00 : f32
    %4 = vector.broadcast %cst : f32 to vector<128x128xf32>
    %5 = vector.broadcast %cst_1 : f32 to vector<128x128xf32>
    %6 = arith.select %3, %4, %5 : vector<128x128xi1>, vector<128x128xf32>
    %7 = arith.truncf %6 : vector<128x128xf32> to vector<128x128xbf16>
    %c0_2 = arith.constant 0 : index
    %c0_3 = arith.constant 0 : index
    %8 = vector.load %arg2[%c0_2, %c0_3] : memref<128x128xbf16, #tpu.memory_space<vmem>>, vector<128x128xbf16>
    %cst_4 = arith.constant dense<0.000000e+00> : vector<128x128xf32>
    %9 = tpu.matmul %7, %8, %cst_4 {dimension_numbers = #tpu.dot_dimension_numbers<[1], [0], [0], [1], [0, 0, 1, 1], [], []>} : vector<128x128xbf16>, vector<128x128xbf16>, vector<128x128xf32> -> vector<128x128xf32>
    %10 = tpu.iota {dimensions = array<i32: 0>} : vector<128x128xi32>
    %c16_i32 = arith.constant 16 : i32
    %c0_i32 = arith.constant 0 : i32
    %11 = arith.cmpi eq, %c16_i32, %c0_i32 : i32
    %c1_i32 = arith.constant 1 : i32
    %12 = arith.select %11, %c1_i32, %c16_i32 : i32
    %13 = vector.broadcast %12 : i32 to vector<128x128xi32>
    %14 = arith.remsi %10, %13 : vector<128x128xi32>
    %c0_i32_5 = arith.constant 0 : i32
    %15 = vector.broadcast %c0_i32_5 : i32 to vector<128x128xi32>
    %16 = arith.cmpi ne, %14, %15 : vector<128x128xi32>
    %c0_i32_6 = arith.constant 0 : i32
    %17 = vector.broadcast %c0_i32_6 : i32 to vector<128x128xi32>
    %18 = arith.cmpi slt, %14, %17 : vector<128x128xi32>
    %c0_i32_7 = arith.constant 0 : i32
    %19 = arith.cmpi slt, %12, %c0_i32_7 : i32
    %20 = vector.broadcast %19 : i1 to vector<128x128xi1>
    %21 = vector.broadcast %20 : vector<128x128xi1> to vector<128x128xi1>
    %22 = arith.xori %18, %21 : vector<128x128xi1>
    %23 = arith.andi %22, %16 : vector<128x128xi1>
    %24 = vector.broadcast %12 : i32 to vector<128x128xi32>
    %25 = arith.addi %14, %24 : vector<128x128xi32>
    %26 = arith.select %23, %25, %14 : vector<128x128xi1>, vector<128x128xi32>
    %c0_i32_8 = arith.constant 0 : i32
    %27 = vector.broadcast %c0_i32_8 : i32 to vector<128x128xi32>
    %28 = arith.cmpi eq, %26, %27 : vector<128x128xi32>
    %c15_i32 = arith.constant 15 : i32
    %29 = vector.broadcast %c15_i32 : i32 to vector<128x128xi32>
    %30 = arith.cmpi eq, %26, %29 : vector<128x128xi32>
    %c1_i32_9 = arith.constant 1 : i32
    %31 = tpu.dynamic_rotate %9 by %c1_i32_9 dim 0 : vector<128x128xf32>, i32 -> vector<128x128xf32>
    %cst_10 = arith.constant 0.000000e+00 : f32
    %32 = vector.broadcast %cst_10 : f32 to vector<128x128xf32>
    %33 = arith.select %28, %32, %31 : vector<128x128xi1>, vector<128x128xf32>
    %c127_i32 = arith.constant 127 : i32
    %34 = tpu.dynamic_rotate %9 by %c127_i32 dim 0 : vector<128x128xf32>, i32 -> vector<128x128xf32>
    %cst_11 = arith.constant 0.000000e+00 : f32
    %35 = vector.broadcast %cst_11 : f32 to vector<128x128xf32>
    %36 = arith.select %30, %35, %34 : vector<128x128xi1>, vector<128x128xf32>
    %37 = tpu.concatenate %33, %9, %36 in 1 : vector<128x128xf32>, vector<128x128xf32>, vector<128x128xf32> -> vector<128x384xf32>
    %38 = arith.truncf %37 : vector<128x384xf32> to vector<128x384xbf16>
    %c0_12 = arith.constant 0 : index
    %c0_13 = arith.constant 0 : index
    %39 = vector.load %arg3[%c0_12, %c0_13] : memref<384x128xbf16, #tpu.memory_space<vmem>>, vector<384x128xbf16>
    %cst_14 = arith.constant dense<0.000000e+00> : vector<128x128xf32>
    %40 = tpu.matmul %38, %39, %cst_14 {dimension_numbers = #tpu.dot_dimension_numbers<[1], [0], [0], [1], [0, 0, 1, 1], [], []>} : vector<128x384xbf16>, vector<384x128xbf16>, vector<128x128xf32> -> vector<128x128xf32>
    %c0_15 = arith.constant 0 : index
    %c0_16 = arith.constant 0 : index
    %41 = vector.load %arg4[%c0_15, %c0_16] : memref<1x128xf32, #tpu.memory_space<vmem>>, vector<1x128xf32>
    %42 = vector.broadcast %41 : vector<1x128xf32> to vector<128x128xf32>
    %43 = arith.addf %40, %42 : vector<128x128xf32>
    %cst_17 = arith.constant 0.000000e+00 : f32
    %44 = vector.broadcast %cst_17 : f32 to vector<128x128xf32>
    %45 = arith.maximumf %43, %44 : vector<128x128xf32>
    %c1_i32_18 = arith.constant 1 : i32
    %46 = tpu.dynamic_rotate %45 by %c1_i32_18 dim 0 : vector<128x128xf32>, i32 -> vector<128x128xf32>
    %cst_19 = arith.constant 0.000000e+00 : f32
    %47 = vector.broadcast %cst_19 : f32 to vector<128x128xf32>
    %48 = arith.select %28, %47, %46 : vector<128x128xi1>, vector<128x128xf32>
    %c127_i32_20 = arith.constant 127 : i32
    %49 = tpu.dynamic_rotate %45 by %c127_i32_20 dim 0 : vector<128x128xf32>, i32 -> vector<128x128xf32>
    %cst_21 = arith.constant 0.000000e+00 : f32
    %50 = vector.broadcast %cst_21 : f32 to vector<128x128xf32>
    %51 = arith.select %30, %50, %49 : vector<128x128xi1>, vector<128x128xf32>
    %52 = tpu.concatenate %48, %45, %51 in 1 : vector<128x128xf32>, vector<128x128xf32>, vector<128x128xf32> -> vector<128x384xf32>
    %53 = arith.truncf %52 : vector<128x384xf32> to vector<128x384xbf16>
    %c0_22 = arith.constant 0 : index
    %c0_23 = arith.constant 0 : index
    %54 = vector.load %arg5[%c0_22, %c0_23] : memref<384x128xbf16, #tpu.memory_space<vmem>>, vector<384x128xbf16>
    %cst_24 = arith.constant dense<0.000000e+00> : vector<128x128xf32>
    %55 = tpu.matmul %53, %54, %cst_24 {dimension_numbers = #tpu.dot_dimension_numbers<[1], [0], [0], [1], [0, 0, 1, 1], [], []>} : vector<128x384xbf16>, vector<384x128xbf16>, vector<128x128xf32> -> vector<128x128xf32>
    %c0_25 = arith.constant 0 : index
    %c0_26 = arith.constant 0 : index
    %56 = vector.load %arg6[%c0_25, %c0_26] : memref<1x128xf32, #tpu.memory_space<vmem>>, vector<1x128xf32>
    %57 = vector.broadcast %56 : vector<1x128xf32> to vector<128x128xf32>
    %58 = arith.addf %55, %57 : vector<128x128xf32>
    %cst_27 = arith.constant 0.000000e+00 : f32
    %59 = vector.broadcast %cst_27 : f32 to vector<128x128xf32>
    %60 = arith.maximumf %58, %59 : vector<128x128xf32>
    %c1_i32_28 = arith.constant 1 : i32
    %61 = tpu.dynamic_rotate %60 by %c1_i32_28 dim 0 : vector<128x128xf32>, i32 -> vector<128x128xf32>
    %cst_29 = arith.constant 0.000000e+00 : f32
    %62 = vector.broadcast %cst_29 : f32 to vector<128x128xf32>
    %63 = arith.select %28, %62, %61 : vector<128x128xi1>, vector<128x128xf32>
    %c127_i32_30 = arith.constant 127 : i32
    %64 = tpu.dynamic_rotate %60 by %c127_i32_30 dim 0 : vector<128x128xf32>, i32 -> vector<128x128xf32>
    %cst_31 = arith.constant 0.000000e+00 : f32
    %65 = vector.broadcast %cst_31 : f32 to vector<128x128xf32>
    %66 = arith.select %30, %65, %64 : vector<128x128xi1>, vector<128x128xf32>
    %67 = tpu.concatenate %63, %60, %66 in 1 : vector<128x128xf32>, vector<128x128xf32>, vector<128x128xf32> -> vector<128x384xf32>
    %68 = arith.truncf %67 : vector<128x384xf32> to vector<128x384xbf16>
    %c0_32 = arith.constant 0 : index
    %c0_33 = arith.constant 0 : index
    %69 = vector.load %arg7[%c0_32, %c0_33] : memref<384x128xbf16, #tpu.memory_space<vmem>>, vector<384x128xbf16>
    %cst_34 = arith.constant dense<0.000000e+00> : vector<128x128xf32>
    %70 = tpu.matmul %68, %69, %cst_34 {dimension_numbers = #tpu.dot_dimension_numbers<[1], [0], [0], [1], [0, 0, 1, 1], [], []>} : vector<128x384xbf16>, vector<384x128xbf16>, vector<128x128xf32> -> vector<128x128xf32>
    %c0_35 = arith.constant 0 : index
    %c0_36 = arith.constant 0 : index
    %71 = vector.load %arg8[%c0_35, %c0_36] : memref<1x128xf32, #tpu.memory_space<vmem>>, vector<1x128xf32>
    %72 = vector.broadcast %71 : vector<1x128xf32> to vector<128x128xf32>
    %73 = arith.addf %70, %72 : vector<128x128xf32>
    %cst_37 = arith.constant 0.000000e+00 : f32
    %74 = vector.broadcast %cst_37 : f32 to vector<128x128xf32>
    %75 = arith.maximumf %73, %74 : vector<128x128xf32>
    %76 = vector.shape_cast %75 : vector<128x128xf32> to vector<8x16x128xf32>
    %cst_38 = arith.constant dense<0xFF800000> : vector<8x128xf32>
    %77 = vector.multi_reduction <maximumf>, %76, %cst_38 [1] : vector<8x16x128xf32> to vector<8x128xf32>
    %c0_39 = arith.constant 0 : index
    %c0_40 = arith.constant 0 : index
    %78 = vector.load %arg9[%c0_39, %c0_40] : memref<8x128xf32, #tpu.memory_space<vmem>>, vector<8x128xf32>
    tpu.vector_store %arg9[%c0_39, %c0_40], %77 {strides = array<i32>} : memref<8x128xf32, #tpu.memory_space<vmem>>, vector<8x128xf32>,
    return
  }
  func.func @transform_0(%arg0: i32) -> (i32, i32) {
    %c0_i32 = arith.constant 0 : i32
    %c0_i32_0 = arith.constant 0 : i32
    return %arg0, %c0_i32 : i32, i32
  }
  func.func @transform_1(%arg0: i32) -> (i32, i32) {
    %c0_i32 = arith.constant 0 : i32
    %c0_i32_0 = arith.constant 0 : i32
    %c0_i32_1 = arith.constant 0 : i32
    return %c0_i32, %c0_i32_0 : i32, i32
  }
  func.func @transform_2(%arg0: i32) -> (i32, i32) {
    %c0_i32 = arith.constant 0 : i32
    %c0_i32_0 = arith.constant 0 : i32
    %c0_i32_1 = arith.constant 0 : i32
    return %c0_i32, %c0_i32_0 : i32, i32
  }
  func.func @transform_3(%arg0: i32) -> (i32, i32) {
    %c0_i32 = arith.constant 0 : i32
    %c0_i32_0 = arith.constant 0 : i32
    %c0_i32_1 = arith.constant 0 : i32
    return %c0_i32, %c0_i32_0 : i32, i32
  }
  func.func @transform_4(%arg0: i32) -> (i32, i32) {
    %c0_i32 = arith.constant 0 : i32
    %c0_i32_0 = arith.constant 0 : i32
    %c0_i32_1 = arith.constant 0 : i32
    return %c0_i32, %c0_i32_0 : i32, i32
  }
  func.func @transform_5(%arg0: i32) -> (i32, i32) {
    %c0_i32 = arith.constant 0 : i32
    %c0_i32_0 = arith.constant 0 : i32
    %c0_i32_1 = arith.constant 0 : i32
    return %c0_i32, %c0_i32_0 : i32, i32
  }
  func.func @transform_6(%arg0: i32) -> (i32, i32) {
    %c0_i32 = arith.constant 0 : i32
    %c0_i32_0 = arith.constant 0 : i32
    %c0_i32_1 = arith.constant 0 : i32
    return %c0_i32, %c0_i32_0 : i32, i32
  }
  func.func @transform_7(%arg0: i32) -> (i32, i32) {
    %c0_i32 = arith.constant 0 : i32
    %c0_i32_0 = arith.constant 0 : i32
    %c0_i32_1 = arith.constant 0 : i32
    return %c0_i32, %c0_i32_0 : i32, i32
  }
  func.func @transform_8(%arg0: i32) -> (i32, i32) {
    %c0_i32 = arith.constant 0 : i32
    %c0_i32_0 = arith.constant 0 : i32
    return %arg0, %c0_i32 : i32, i32
  }
}

</mosaic_0001>

<llo_original>
// kernel: tpu_custom_call.1
$region0: #{tpu_custom_call.1}
  #allocation0 [shape = 'u32[]', space=smem, size = 0x4, offset = 0x4, fixed_abs, tag = 'smem constant byte address 0x4 - core index']
  #allocation1 [shape = 'u32[144,128]{1,0:T(1,128)}', space=vmem, size = 0x12000, scoped, tag = 'internal scratch']
  %s0 = inlined_call_operand.vmem [shape: s32[256,1], index: 0, kind: input, shape index: {}]
  %s1 = inlined_call_operand.vmem [shape: bf16[128,128], index: 1, kind: input, shape index: {}]
  %s2 = inlined_call_operand.vmem [shape: bf16[384,128], index: 2, kind: input, shape index: {}]
  %s3 = inlined_call_operand.vmem [shape: f32[1,128], index: 3, kind: input, shape index: {}]
  %s4 = inlined_call_operand.hbm [shape: bf16[384,128], index: 4, kind: input, shape index: {}]
  %s5 = inlined_call_operand.vmem [shape: f32[1,128], index: 5, kind: input, shape index: {}]
  %s6 = inlined_call_operand.hbm [shape: bf16[384,128], index: 6, kind: input, shape index: {}]
  %s7 = inlined_call_operand.vmem [shape: f32[1,128], index: 7, kind: input, shape index: {}]
  %s8 = inlined_call_operand.hbm [shape: f32[16,128], index: 8, kind: output, shape index: {}]
  %s9 = sld [smem:[#allocation0]]
  $region73: #{tpu_custom_call.1} parent=0
    _
  %s11 = ssub.s32 1, %s9
  %s12 = scalar_select 0, %s11, %s9
  $region1: #{tpu_custom_call.1} parent=0
    #allocation2 [shape = 'u8[98304]{0}', space=vmem, size = 0x18000, scoped, tag = 'input window, operand 4, single buffered']
    #allocation3 [shape = 's32[2]{0}', space=sflag, size = 0x8, scoped, tag = 'scoped memory for tpu_custom_call.1']
    #allocation4 [shape = 's32[2]{0}', space=sflag, size = 0x8, scoped, tag = 'scoped memory for tpu_custom_call.1']
    #allocation5 [shape = 'u8[98304]{0}', space=vmem, size = 0x18000, scoped, tag = 'input window, operand 6, single buffered']
    #allocation6 [shape = 's32[1]{0}', space=sflag, size = 0x4, scoped, tag = 'scoped memory for tpu_custom_call.1']
    #allocation7 [shape = 'u8[8192]{0}', space=vmem, size = 0x2000, scoped, tag = 'output window, operand 0']
    %13 = vsyncpa [#allocation3], 0
    %14 = vsyncpa [#allocation6], 0
    %15 = vsyncpa [#allocation4], 0
    %s16 = scalar_lea.sflag [#allocation4], 1
    %17 = vsyncpa %s16, 0
    loop: start=0, step=1, limit=4
    $region2: #{tpu_custom_call.1} parent=1 // loop_pre_header
      _
    $region3: #{tpu_custom_call.1} parent=1 // loop_header
      %s19 = sphi 0, %s23
      %p20 = scmp.ge.s32.totalorder %s19, 4
      %s29 = sphi 0, %s31
      %s32 = sphi 0, %s29
      %s33 = sphi 0, %s32
      %s49 = sphi 0, %s33
      %s53 = sphi 0, %s53
      %s55 = sphi 0, %s53
      %s56 = sphi 0, %s55
      %s70 = sphi 0, %s56
      %s74 = sphi 0, %s74
      %s76 = sphi 0, %s74
      %s77 = sphi 0, %s76
      %s91 = sphi 0, %s77
      %s95 = sphi 0, %s95
      %s97 = sphi 0, %s95
      %s98 = sphi 0, %s97
      %s112 = sphi 0, %s98
      %s116 = sphi 0, %s116
      %s118 = sphi 0, %s116
      %s119 = sphi 0, %s118
      %s133 = sphi 0, %s119
      %s137 = sphi 0, %s137
      %s139 = sphi 0, %s137
      %s140 = sphi 0, %s139
      %s154 = sphi 0, %s140
      %s158 = sphi 0, %s158
      %s160 = sphi 0, %s158
      %s161 = sphi 0, %s160
      %s175 = sphi 0, %s161
      %s179 = sphi 0, %s179
      %s181 = sphi 0, %s179
      %s182 = sphi 0, %s181
      %s196 = sphi 0, %s182
      %s202 = sphi 0, %s204
      %s205 = sphi 0, %s202
      %s206 = sphi 0, %s205
      %s222 = sphi 0, %s206
    $region4: #{tpu_custom_call.1} parent=1 // loop_header_branch
      %22 = sbr.rel (%p20) target = $region8
    $region5: #{tpu_custom_call.1} parent=1 // loop_body
      %s24 = ssub.s32 %s19, 1
      %s25 = ssub.s32 %s19, 2
      %s26 = sadd.s32 %s19, 1
      %s27 = ssub.s32 %s19, %s26
      %p28 = scmp.eq.s32.totalorder %s27, 0
      %s30 = sadd.s32 %s29, 1
      %s31 = scalar_select %p28, %s29, %s30
      %p34 = pneg %p28
      %p35 = scmp.eq.s32.totalorder %s19, 1
      %p36 = por %p34, %p35
      %p37 = scmp.ne.s32.totalorder %s29, %s32
      %p38 = scmp.eq.s32.totalorder %s19, 0
      %p39 = por %p37, %p38
      %p40 = scmp.ne.s32.totalorder %s29, %s32
      %p41 = scmp.eq.s32.totalorder %s24, 1
      %p42 = por %p40, %p41
      %p43 = scmp.ne.s32.totalorder %s32, %s33
      %p44 = scmp.eq.s32.totalorder %s24, 0
      %p45 = por %p43, %p44
      %p46 = scmp.ne.s32.totalorder %s32, %s33
      %p47 = scmp.eq.s32.totalorder %s25, 1
      %p48 = por %p46, %p47
      %p50 = scmp.ne.s32.totalorder %s33, %s49
      %p51 = scmp.eq.s32.totalorder %s25, 0
      %p52 = por %p50, %p51
      %s54 = sadd.s32 %s53, 1
      %p57 = scmp.eq.s32.totalorder %s19, 1
      %p58 = scmp.ne.s32.totalorder %s53, %s55
      %p59 = scmp.eq.s32.totalorder %s19, 0
      %p60 = por %p58, %p59
      %p61 = scmp.ne.s32.totalorder %s53, %s55
      %p62 = scmp.eq.s32.totalorder %s24, 1
      %p63 = por %p61, %p62
      %p64 = scmp.ne.s32.totalorder %s55, %s56
      %p65 = scmp.eq.s32.totalorder %s24, 0
      %p66 = por %p64, %p65
      %p67 = scmp.ne.s32.totalorder %s55, %s56
      %p68 = scmp.eq.s32.totalorder %s25, 1
      %p69 = por %p67, %p68
      %p71 = scmp.ne.s32.totalorder %s56, %s70
      %p72 = scmp.eq.s32.totalorder %s25, 0
      %p73 = por %p71, %p72
      %s75 = sadd.s32 %s74, 1
      %p78 = scmp.eq.s32.totalorder %s19, 1
      %p79 = scmp.ne.s32.totalorder %s74, %s76
      %p80 = scmp.eq.s32.totalorder %s19, 0
      %p81 = por %p79, %p80
      %p82 = scmp.ne.s32.totalorder %s74, %s76
      %p83 = scmp.eq.s32.totalorder %s24, 1
      %p84 = por %p82, %p83
      %p85 = scmp.ne.s32.totalorder %s76, %s77
      %p86 = scmp.eq.s32.totalorder %s24, 0
      %p87 = por %p85, %p86
      %p88 = scmp.ne.s32.totalorder %s76, %s77
      %p89 = scmp.eq.s32.totalorder %s25, 1
      %p90 = por %p88, %p89
      %p92 = scmp.ne.s32.totalorder %s77, %s91
      %p93 = scmp.eq.s32.totalorder %s25, 0
      %p94 = por %p92, %p93
      %s96 = sadd.s32 %s95, 1
      %p99 = scmp.eq.s32.totalorder %s19, 1
      %p100 = scmp.ne.s32.totalorder %s95, %s97
      %p101 = scmp.eq.s32.totalorder %s19, 0
      %p102 = por %p100, %p101
      %p103 = scmp.ne.s32.totalorder %s95, %s97
      %p104 = scmp.eq.s32.totalorder %s24, 1
      %p105 = por %p103, %p104
      %p106 = scmp.ne.s32.totalorder %s97, %s98
      %p107 = scmp.eq.s32.totalorder %s24, 0
      %p108 = por %p106, %p107
      %p109 = scmp.ne.s32.totalorder %s97, %s98
      %p110 = scmp.eq.s32.totalorder %s25, 1
      %p111 = por %p109, %p110
      %p113 = scmp.ne.s32.totalorder %s98, %s112
      %p114 = scmp.eq.s32.totalorder %s25, 0
      %p115 = por %p113, %p114
      %s117 = sadd.s32 %s116, 1
      %p120 = scmp.eq.s32.totalorder %s19, 1
      %p121 = scmp.ne.s32.totalorder %s116, %s118
      %p122 = scmp.eq.s32.totalorder %s19, 0
      %p123 = por %p121, %p122
      %p124 = scmp.ne.s32.totalorder %s116, %s118
      %p125 = scmp.eq.s32.totalorder %s24, 1
      %p126 = por %p124, %p125
      %p127 = scmp.ne.s32.totalorder %s118, %s119
      %p128 = scmp.eq.s32.totalorder %s24, 0
      %p129 = por %p127, %p128
      %p130 = scmp.ne.s32.totalorder %s118, %s119
      %p131 = scmp.eq.s32.totalorder %s25, 1
      %p132 = por %p130, %p131
      %p134 = scmp.ne.s32.totalorder %s119, %s133
      %p135 = scmp.eq.s32.totalorder %s25, 0
      %p136 = por %p134, %p135
      %s138 = sadd.s32 %s137, 1
      %p141 = scmp.eq.s32.totalorder %s19, 1
      %p142 = scmp.ne.s32.totalorder %s137, %s139
      %p143 = scmp.eq.s32.totalorder %s19, 0
      %p144 = por %p142, %p143
      %p145 = scmp.ne.s32.totalorder %s137, %s139
      %p146 = scmp.eq.s32.totalorder %s24, 1
      %p147 = por %p145, %p146
      %p148 = scmp.ne.s32.totalorder %s139, %s140
      %p149 = scmp.eq.s32.totalorder %s24, 0
      %p150 = por %p148, %p149
      %p151 = scmp.ne.s32.totalorder %s139, %s140
      %p152 = scmp.eq.s32.totalorder %s25, 1
      %p153 = por %p151, %p152
      %p155 = scmp.ne.s32.totalorder %s140, %s154
      %p156 = scmp.eq.s32.totalorder %s25, 0
      %p157 = por %p155, %p156
      %s159 = sadd.s32 %s158, 1
      %p162 = scmp.eq.s32.totalorder %s19, 1
      %p163 = scmp.ne.s32.totalorder %s158, %s160
      %p164 = scmp.eq.s32.totalorder %s19, 0
      %p165 = por %p163, %p164
      %p166 = scmp.ne.s32.totalorder %s158, %s160
      %p167 = scmp.eq.s32.totalorder %s24, 1
      %p168 = por %p166, %p167
      %p169 = scmp.ne.s32.totalorder %s160, %s161
      %p170 = scmp.eq.s32.totalorder %s24, 0
      %p171 = por %p169, %p170
      %p172 = scmp.ne.s32.totalorder %s160, %s161
      %p173 = scmp.eq.s32.totalorder %s25, 1
      %p174 = por %p172, %p173
      %p176 = scmp.ne.s32.totalorder %s161, %s175
      %p177 = scmp.eq.s32.totalorder %s25, 0
      %p178 = por %p176, %p177
      %s180 = sadd.s32 %s179, 1
      %p183 = scmp.eq.s32.totalorder %s19, 1
      %p184 = scmp.ne.s32.totalorder %s179, %s181
      %p185 = scmp.eq.s32.totalorder %s19, 0
      %p186 = por %p184, %p185
      %p187 = scmp.ne.s32.totalorder %s179, %s181
      %p188 = scmp.eq.s32.totalorder %s24, 1
      %p189 = por %p187, %p188
      %p190 = scmp.ne.s32.totalorder %s181, %s182
      %p191 = scmp.eq.s32.totalorder %s24, 0
      %p192 = por %p190, %p191
      %p193 = scmp.ne.s32.totalorder %s181, %s182
      %p194 = scmp.eq.s32.totalorder %s25, 1
      %p195 = por %p193, %p194
      %p197 = scmp.ne.s32.totalorder %s182, %s196
      %p198 = scmp.eq.s32.totalorder %s25, 0
      %p199 = por %p197, %p198
      %s200 = ssub.s32 %s19, %s26
      %p201 = scmp.eq.s32.totalorder %s200, 0
      %s203 = sadd.s32 %s202, 1
      %s204 = scalar_select %p201, %s202, %s203
      %p207 = pneg %p201
      %p208 = scmp.eq.s32.totalorder %s19, 1
      %p209 = por %p207, %p208
      %p210 = scmp.ne.s32.totalorder %s202, %s205
      %p211 = scmp.eq.s32.totalorder %s19, 0
      %p212 = por %p210, %p211
      %p213 = scmp.ne.s32.totalorder %s202, %s205
      %p214 = scmp.eq.s32.totalorder %s24, 1
      %p215 = por %p213, %p214
      %p216 = scmp.ne.s32.totalorder %s205, %s206
      %p217 = scmp.eq.s32.totalorder %s24, 0
      %p218 = por %p216, %p217
      %p219 = scmp.ne.s32.totalorder %s205, %s206
      %p220 = scmp.eq.s32.totalorder %s25, 1
      %p221 = por %p219, %p220
      %p223 = scmp.ne.s32.totalorder %s206, %s222
      %p224 = scmp.eq.s32.totalorder %s25, 0
      %p225 = por %p223, %p224
      %p226 = scmp.le.s32.totalorder 1, %s19
      %p227 = scmp.lt.s32.totalorder %s19, 3
      %p228 = pnand %p226, %p227
      %p229 = pneg %p228
      // Predicated region
      $region9: #{tpu_custom_call.1} parent=5 // pred_check
        _
      $region10: #{tpu_custom_call.1} parent=5 // pred_check_branch
        %231 = sbr.rel (%p228) target = $region12
      $region11: #{tpu_custom_call.1} parent=5 // pred_region
        %s232 = ssub.s32 %s19, 1
        // Predicated region
        $region13: #{tpu_custom_call.1} parent=11 // pred_check
          %p233 = pneg %p66
        $region14: #{tpu_custom_call.1} parent=11 // pred_check_branch
          %235 = sbr.rel (%p233) target = $region16
        $region15: #{tpu_custom_call.1} parent=11 // pred_region
          _
        $region16: #{tpu_custom_call.1} parent=11 // pred_fallthru
          _
        // Predicated region
        $region17: #{tpu_custom_call.1} parent=11 // pred_check
          %p236 = pneg %p87
        $region18: #{tpu_custom_call.1} parent=11 // pred_check_branch
          %238 = sbr.rel (%p236) target = $region20
        $region19: #{tpu_custom_call.1} parent=11 // pred_region
          _
        $region20: #{tpu_custom_call.1} parent=11 // pred_fallthru
          _
        // Predicated region
        $region21: #{tpu_custom_call.1} parent=11 // pred_check
          %p239 = pneg %p108
        $region22: #{tpu_custom_call.1} parent=11 // pred_check_branch
          %241 = sbr.rel (%p239) target = $region24
        $region23: #{tpu_custom_call.1} parent=11 // pred_region
          _
        $region24: #{tpu_custom_call.1} parent=11 // pred_fallthru
          _
        // Predicated region
        $region25: #{tpu_custom_call.1} parent=11 // pred_check
          %p242 = pneg %p129
        $region26: #{tpu_custom_call.1} parent=11 // pred_check_branch
          %244 = sbr.rel (%p242) target = $region28
        $region27: #{tpu_custom_call.1} parent=11 // pred_region
          %s246 = ssub.s32 3072, 3072
          %247 = vsyncadd [#allocation3], %s246
          %s248 = sshll.u32 [#allocation2], 4
          %s249 = int_to_ptr.vmem [resolvable:$true] %s248
          %254 = dma.hbm_to_vmem [thread:$0]  %s4, 3072, %s249, [#allocation3], 64, 64, 4
        $region28: #{tpu_custom_call.1} parent=11 // pred_fallthru
          _
        // Predicated region
        $region29: #{tpu_custom_call.1} parent=11 // pred_check
          %p255 = pneg %p150
        $region30: #{tpu_custom_call.1} parent=11 // pred_check_branch
          %257 = sbr.rel (%p255) target = $region32
        $region31: #{tpu_custom_call.1} parent=11 // pred_region
          _
        $region32: #{tpu_custom_call.1} parent=11 // pred_fallthru
          _
        // Predicated region
        $region33: #{tpu_custom_call.1} parent=11 // pred_check
          %p258 = pneg %p171
        $region34: #{tpu_custom_call.1} parent=11 // pred_check_branch
          %260 = sbr.rel (%p258) target = $region36
        $region35: #{tpu_custom_call.1} parent=11 // pred_region
          %s262 = ssub.s32 3072, 3072
          %263 = vsyncadd [#allocation6], %s262
          %s264 = sshll.u32 [#allocation5], 4
          %s265 = int_to_ptr.vmem [resolvable:$true] %s264
          %270 = dma.hbm_to_vmem [thread:$0]  %s6, 3072, %s265, [#allocation6], 64, 64, 4
        $region36: #{tpu_custom_call.1} parent=11 // pred_fallthru
          _
        // Predicated region
        $region37: #{tpu_custom_call.1} parent=11 // pred_check
          %p271 = pneg %p192
        $region38: #{tpu_custom_call.1} parent=11 // pred_check_branch
          %273 = sbr.rel (%p271) target = $region40
        $region39: #{tpu_custom_call.1} parent=11 // pred_region
          _
        $region40: #{tpu_custom_call.1} parent=11 // pred_fallthru
          _
      $region12: #{tpu_custom_call.1} parent=5 // pred_fallthru
        _
      %p274 = scmp.lt.s32.totalorder %s19, 2
      // Predicated region
      $region41: #{tpu_custom_call.1} parent=5 // pred_check
        %p275 = pneg %p274
      $region42: #{tpu_custom_call.1} parent=5 // pred_check_branch
        %277 = sbr.rel (%p275) target = $region44
      $region43: #{tpu_custom_call.1} parent=5 // pred_region
        // Predicated region
        $region45: #{tpu_custom_call.1} parent=43 // pred_check
          %p278 = pneg %p39
        $region46: #{tpu_custom_call.1} parent=43 // pred_check_branch
          %280 = sbr.rel (%p278) target = $region48
        $region47: #{tpu_custom_call.1} parent=43 // pred_region
          %s281 = smul.u32 16, %s19
          %p282 = scmp.lt.s32.totalorder %s281, 31
          %s283 = scalar_select %p282, %s281, 31
          %s284 = smul.addr %s283, 8
          %s285 = scalar_lea.vmem %s0, %s284
          %s286 = smul.u32 16, %s19
        $region48: #{tpu_custom_call.1} parent=43 // pred_fallthru
          _
      $region44: #{tpu_custom_call.1} parent=5 // pred_fallthru
        _
      %p287 = scmp.le.s32.totalorder 1, %s19
      %p288 = scmp.lt.s32.totalorder %s19, 3
      %p289 = pnand %p287, %p288
      %p290 = pneg %p289
      // Predicated region
      $region49: #{tpu_custom_call.1} parent=5 // pred_check
        _
      $region50: #{tpu_custom_call.1} parent=5 // pred_check_branch
        %292 = sbr.rel (%p289) target = $region52
      $region51: #{tpu_custom_call.1} parent=5 // pred_region
        %s293 = ssub.s32 %s19, 1
        // Predicated region
        $region53: #{tpu_custom_call.1} parent=51 // pred_check
          %p294 = pneg %p129
        $region54: #{tpu_custom_call.1} parent=51 // pred_check_branch
          %296 = sbr.rel (%p294) target = $region56
        $region55: #{tpu_custom_call.1} parent=51 // pred_region
          %297 = dma.done [#allocation3], 3072
        $region56: #{tpu_custom_call.1} parent=51 // pred_fallthru
          _
        // Predicated region
        $region57: #{tpu_custom_call.1} parent=51 // pred_check
          %p298 = pneg %p171
        $region58: #{tpu_custom_call.1} parent=51 // pred_check_branch
          %300 = sbr.rel (%p298) target = $region60
        $region59: #{tpu_custom_call.1} parent=51 // pred_region
          %301 = dma.done [#allocation6], 3072
        $region60: #{tpu_custom_call.1} parent=51 // pred_fallthru
          _
        %s302 = smul.u32 16, %s24
        %p303 = scmp.lt.s32.totalorder %s302, 31
        %s304 = scalar_select %p303, %s302, 31
        %s305 = smul.addr %s304, 8
        %s306 = scalar_lea.vmem %s0, %s305
        %p307 = pneg %p45
        %p308 = pneg %p42
        %p309 = pneg %p66
        %p310 = pneg %p63
        %p311 = pneg %p87
        %p312 = pneg %p84
        %p313 = pneg %p108
        %p314 = pneg %p105
        %p315 = pneg %p129
        %p316 = pneg %p126
        %p317 = pneg %p150
        %p318 = pneg %p147
        %p319 = pneg %p171
        %p320 = pneg %p168
        %p321 = pneg %p192
        %p322 = pneg %p189
        %p323 = pneg %p218
        %p324 = pneg %p215
        %s325 = sand.u32 %s205, 1
        %s326 = scalar_lea.sflag [#allocation4], %s325
        %s327 = sand.u32 %s205, 1
        %s328 = smul.addr %s327, 8
        %s329 = scalar_lea.vmem [#allocation7], %s328
        %s330 = smul.u32 16, %s24
        %p331 = scmp.lt.s32.totalorder %s330, 31
        %s332 = scalar_select %p331, %s330, 31
        %s333 = smul.addr %s332, 8
        %s334 = scalar_lea.vmem %s0, %s333
        %s335 = smul.u32 16, %s24
        %v337 = vld [vmem:[%s334] sm:$0xff]
        %v338 = vld [vmem:[%s334 + $0x8] sm:$0xff]
        %v339 = vld [vmem:[%s334 + $0x10] sm:$0xff]
        %v340 = vld [vmem:[%s334 + $0x18] sm:$0xff]
        %v341 = vld [vmem:[%s334 + $0x20] sm:$0xff]
        %v342 = vld [vmem:[%s334 + $0x28] sm:$0xff]
        %v343 = vld [vmem:[%s334 + $0x30] sm:$0xff]
        %v344 = vld [vmem:[%s334 + $0x38] sm:$0xff]
        %v345 = vld [vmem:[%s334 + $0x40] sm:$0xff]
        %v346 = vld [vmem:[%s334 + $0x48] sm:$0xff]
        %v347 = vld [vmem:[%s334 + $0x50] sm:$0xff]
        %v348 = vld [vmem:[%s334 + $0x58] sm:$0xff]
        %v349 = vld [vmem:[%s334 + $0x60] sm:$0xff]
        %v350 = vld [vmem:[%s334 + $0x68] sm:$0xff]
        %v351 = vld [vmem:[%s334 + $0x70] sm:$0xff]
        %v352 = vld [vmem:[%s334 + $0x78] sm:$0xff]
        %v353 = vlaneseq
        %v354 = vand.u32 %v353, 127
        %355 = vset.pattern.permute.xlu0 0
        %356 = vperm.xlu0 %355, %v337
        %v357 = vpop.permute.xlu0 %356
        %358 = vset.pattern.permute.xlu0 0
        %359 = vperm.xlu0 %358, %v338
        %v360 = vpop.permute.xlu0 %359
        %361 = vset.pattern.permute.xlu0 0
        %362 = vperm.xlu0 %361, %v339
        %v363 = vpop.permute.xlu0 %362
        %364 = vset.pattern.permute.xlu0 0
        %365 = vperm.xlu0 %364, %v340
        %v366 = vpop.permute.xlu0 %365
        %367 = vset.pattern.permute.xlu0 0
        %368 = vperm.xlu0 %367, %v341
        %v369 = vpop.permute.xlu0 %368
        %370 = vset.pattern.permute.xlu0 0
        %371 = vperm.xlu0 %370, %v342
        %v372 = vpop.permute.xlu0 %371
        %373 = vset.pattern.permute.xlu0 0
        %374 = vperm.xlu0 %373, %v343
        %v375 = vpop.permute.xlu0 %374
        %376 = vset.pattern.permute.xlu0 0
        %377 = vperm.xlu0 %376, %v344
        %v378 = vpop.permute.xlu0 %377
        %379 = vset.pattern.permute.xlu0 0
        %380 = vperm.xlu0 %379, %v345
        %v381 = vpop.permute.xlu0 %380
        %382 = vset.pattern.permute.xlu0 0
        %383 = vperm.xlu0 %382, %v346
        %v384 = vpop.permute.xlu0 %383
        %385 = vset.pattern.permute.xlu0 0
        %386 = vperm.xlu0 %385, %v347
        %v387 = vpop.permute.xlu0 %386
        %388 = vset.pattern.permute.xlu0 0
        %389 = vperm.xlu0 %388, %v348
        %v390 = vpop.permute.xlu0 %389
        %391 = vset.pattern.permute.xlu0 0
        %392 = vperm.xlu0 %391, %v349
        %v393 = vpop.permute.xlu0 %392
        %394 = vset.pattern.permute.xlu0 0
        %395 = vperm.xlu0 %394, %v350
        %v396 = vpop.permute.xlu0 %395
        %397 = vset.pattern.permute.xlu0 0
        %398 = vperm.xlu0 %397, %v351
        %v399 = vpop.permute.xlu0 %398
        %400 = vset.pattern.permute.xlu0 0
        %401 = vperm.xlu0 %400, %v352
        %v402 = vpop.permute.xlu0 %401
        %vm403 = vcmp.eq.s32.totalorder %v354, %v357
        %vm404 = vcmp.eq.s32.totalorder %v354, %v360
        %vm405 = vcmp.eq.s32.totalorder %v354, %v363
        %vm406 = vcmp.eq.s32.totalorder %v354, %v366
        %vm407 = vcmp.eq.s32.totalorder %v354, %v369
        %vm408 = vcmp.eq.s32.totalorder %v354, %v372
        %vm409 = vcmp.eq.s32.totalorder %v354, %v375
        %vm410 = vcmp.eq.s32.totalorder %v354, %v378
        %vm411 = vcmp.eq.s32.totalorder %v354, %v381
        %vm412 = vcmp.eq.s32.totalorder %v354, %v384
        %vm413 = vcmp.eq.s32.totalorder %v354, %v387
        %vm414 = vcmp.eq.s32.totalorder %v354, %v390
        %vm415 = vcmp.eq.s32.totalorder %v354, %v393
        %vm416 = vcmp.eq.s32.totalorder %v354, %v396
        %vm417 = vcmp.eq.s32.totalorder %v354, %v399
        %vm418 = vcmp.eq.s32.totalorder %v354, %v402
        %v419 = vsel %vm403, 1.0, 0.0
        %v420 = vsel %vm404, 1.0, 0.0
        %v421 = vsel %vm405, 1.0, 0.0
        %v422 = vsel %vm406, 1.0, 0.0
        %v423 = vsel %vm407, 1.0, 0.0
        %v424 = vsel %vm408, 1.0, 0.0
        %v425 = vsel %vm409, 1.0, 0.0
        %v426 = vsel %vm410, 1.0, 0.0
        %v427 = vsel %vm411, 1.0, 0.0
        %v428 = vsel %vm412, 1.0, 0.0
        %v429 = vsel %vm413, 1.0, 0.0
        %v430 = vsel %vm414, 1.0, 0.0
        %v431 = vsel %vm415, 1.0, 0.0
        %v432 = vsel %vm416, 1.0, 0.0
        %v433 = vsel %vm417, 1.0, 0.0
        %v434 = vsel %vm418, 1.0, 0.0
        %v435 = vpack.c.bf16 %v420, %v419
        %v436 = vpack.c.bf16 %v422, %v421
        %v437 = vpack.c.bf16 %v424, %v423
        %v438 = vpack.c.bf16 %v426, %v425
        %v439 = vpack.c.bf16 %v428, %v427
        %v440 = vpack.c.bf16 %v430, %v429
        %v441 = vpack.c.bf16 %v432, %v431
        %v442 = vpack.c.bf16 %v434, %v433
        %v443 = vld [vmem:[%s1] sm:$0xf]
        %v444 = vld [vmem:[%s1 + $0x4] sm:$0xf]
        %v445 = vld [vmem:[%s1 + $0x8] sm:$0xf]
        %v446 = vld [vmem:[%s1 + $0xc] sm:$0xf]
        %v447 = vld [vmem:[%s1 + $0x10] sm:$0xf]
        %v448 = vld [vmem:[%s1 + $0x14] sm:$0xf]
        %v449 = vld [vmem:[%s1 + $0x18] sm:$0xf]
        %v450 = vld [vmem:[%s1 + $0x1c] sm:$0xf]
        %v451 = vld [vmem:[%s1 + $0x20] sm:$0xf]
        %v452 = vld [vmem:[%s1 + $0x24] sm:$0xf]
        %v453 = vld [vmem:[%s1 + $0x28] sm:$0xf]
        %v454 = vld [vmem:[%s1 + $0x2c] sm:$0xf]
        %v455 = vld [vmem:[%s1 + $0x30] sm:$0xf]
        %v456 = vld [vmem:[%s1 + $0x34] sm:$0xf]
        %v457 = vld [vmem:[%s1 + $0x38] sm:$0xf]
        %v458 = vld [vmem:[%s1 + $0x3c] sm:$0xf]
        %v475 = vunpack.c.l.b16 %v443
        %v476 = vunpack.c.l.b16 %v444
        %v477 = vunpack.c.l.b16 %v445
        %v478 = vunpack.c.l.b16 %v446
        %v479 = vunpack.c.l.b16 %v447
        %v480 = vunpack.c.l.b16 %v448
        %v481 = vunpack.c.l.b16 %v449
        %v482 = vunpack.c.l.b16 %v450
        %v483 = vunpack.c.l.b16 %v451
        %v484 = vunpack.c.l.b16 %v452
        %v485 = vunpack.c.l.b16 %v453
        %v486 = vunpack.c.l.b16 %v454
        %v487 = vunpack.c.l.b16 %v455
        %v488 = vunpack.c.l.b16 %v456
        %v489 = vunpack.c.l.b16 %v457
        %v490 = vunpack.c.l.b16 %v458
        %v491 = vpack.c.b16 %v476, %v475
        %v492 = vpack.c.b16 %v478, %v477
        %v493 = vpack.c.b16 %v480, %v479
        %v494 = vpack.c.b16 %v482, %v481
        %v495 = vpack.c.b16 %v484, %v483
        %v496 = vpack.c.b16 %v486, %v485
        %v497 = vpack.c.b16 %v488, %v487
        %v498 = vpack.c.b16 %v490, %v489
        %507 = vmatprep.subr.bf16.mxu0 0
        %508 = vmatpush1.bf16.msra.mxu0 %v498
        %509 = vmatprep.subr.bf16.mxu0 0
        %510 = vmatpush1.bf16.msra.mxu0 %v497
        %511 = vmatprep.subr.bf16.mxu0 0
        %512 = vmatpush1.bf16.msra.mxu0 %v496
        %513 = vmatprep.subr.bf16.mxu0 0
        %514 = vmatpush1.bf16.msra.mxu0 %v495
        %515 = vmatprep.subr.bf16.mxu0 0
        %516 = vmatpush1.bf16.msra.mxu0 %v494
        %517 = vmatprep.subr.bf16.mxu0 0
        %518 = vmatpush1.bf16.msra.mxu0 %v493
        %519 = vmatprep.subr.bf16.mxu0 0
        %520 = vmatpush1.bf16.msra.mxu0 %v492
        %521 = vmatprep.subr.bf16.mxu0 0
        %522 = vmatpush1.bf16.msra.mxu0 %v491
        %523 = vmatprep.subr.bf16.mxu0 0
        %524 = vmatpush2.bf16.msra.mxu0 0
        %525 = vmatprep.subr.bf16.mxu0 0
        %526 = vmatpush2.bf16.msra.mxu0 0
        %527 = vmatprep.subr.bf16.mxu0 0
        %528 = vmatpush2.bf16.msra.mxu0 0
        %529 = vmatprep.subr.bf16.mxu0 0
        %530 = vmatpush2.bf16.msra.mxu0 0
        %531 = vmatprep.subr.bf16.mxu0 0
        %532 = vmatpush2.bf16.msra.mxu0 0
        %533 = vmatprep.subr.bf16.mxu0 0
        %534 = vmatpush2.bf16.msra.mxu0 0
        %535 = vmatprep.subr.bf16.mxu0 0
        %536 = vmatpush2.bf16.msra.mxu0 0
        %537 = vmatprep.subr.bf16.mxu0 0
        %538 = vmatpush2.bf16.msra.mxu0 0
        %539 = vmatprep.mubr.bf16.mxu0 0
        %540 = vmatmul.mubr.bf16.gmra.mxu0 %v435
        %v541 = vpop.f32.mrf.mxu0
        %v542 = vadd.f32 0.0, %v541
        %v543 = vpop.f32.mrf.mxu0
        %v544 = vpop.f32.mrf.mxu0
        %v545 = vadd.f32 0.0, %v544
        %v546 = vpop.f32.mrf.mxu0
        %547 = vmatprep.mubr.bf16.mxu0 0
        %548 = vmatmul.mubr.bf16.gmra.mxu0 %v436
        %v549 = vpop.f32.mrf.mxu0
        %v550 = vadd.f32 0.0, %v549
        %v551 = vpop.f32.mrf.mxu0
        %v552 = vpop.f32.mrf.mxu0
        %v553 = vadd.f32 0.0, %v552
        %v554 = vpop.f32.mrf.mxu0
        %555 = vmatprep.mubr.bf16.mxu0 0
        %556 = vmatmul.mubr.bf16.gmra.mxu0 %v437
        %v557 = vpop.f32.mrf.mxu0
        %v558 = vadd.f32 0.0, %v557
        %v559 = vpop.f32.mrf.mxu0
        %v560 = vpop.f32.mrf.mxu0
        %v561 = vadd.f32 0.0, %v560
        %v562 = vpop.f32.mrf.mxu0
        %563 = vmatprep.mubr.bf16.mxu0 0
        %564 = vmatmul.mubr.bf16.gmra.mxu0 %v438
        %v565 = vpop.f32.mrf.mxu0
        %v566 = vadd.f32 0.0, %v565
        %v567 = vpop.f32.mrf.mxu0
        %v568 = vpop.f32.mrf.mxu0
        %v569 = vadd.f32 0.0, %v568
        %v570 = vpop.f32.mrf.mxu0
        %571 = vmatprep.mubr.bf16.mxu0 0
        %572 = vmatmul.mubr.bf16.gmra.mxu0 %v439
        %v573 = vpop.f32.mrf.mxu0
        %v574 = vadd.f32 0.0, %v573
        %v575 = vpop.f32.mrf.mxu0
        %v576 = vpop.f32.mrf.mxu0
        %v577 = vadd.f32 0.0, %v576
        %v578 = vpop.f32.mrf.mxu0
        %579 = vmatprep.mubr.bf16.mxu0 0
        %580 = vmatmul.mubr.bf16.gmra.mxu0 %v440
        %v581 = vpop.f32.mrf.mxu0
        %v582 = vadd.f32 0.0, %v581
        %v583 = vpop.f32.mrf.mxu0
        %v584 = vpop.f32.mrf.mxu0
        %v585 = vadd.f32 0.0, %v584
        %v586 = vpop.f32.mrf.mxu0
        %587 = vmatprep.mubr.bf16.mxu0 0
        %588 = vmatmul.mubr.bf16.gmra.mxu0 %v441
        %v589 = vpop.f32.mrf.mxu0
        %v590 = vadd.f32 0.0, %v589
        %v591 = vpop.f32.mrf.mxu0
        %v592 = vpop.f32.mrf.mxu0
        %v593 = vadd.f32 0.0, %v592
        %v594 = vpop.f32.mrf.mxu0
        %595 = vmatprep.mubr.bf16.mxu0 0
        %596 = vmatmul.mubr.bf16.gmra.mxu0 %v442
        %v597 = vpop.f32.mrf.mxu0
        %v598 = vadd.f32 0.0, %v597
        %v599 = vpop.f32.mrf.mxu0
        %v600 = vpop.f32.mrf.mxu0
        %v601 = vadd.f32 0.0, %v600
        %v602 = vpop.f32.mrf.mxu0
        %603 = vdwg.mxu0
        %v604 = vlaneseq
        %v605 = vshrl.u32 %v604, 7
        %v606 = vadd.s32 %v605, 8
        %v607 = vadd.s32 %v605, 16
        %v608 = vadd.s32 %v605, 24
        %v609 = vadd.s32 %v605, 32
        %v610 = vadd.s32 %v605, 40
        %v611 = vadd.s32 %v605, 48
        %v612 = vadd.s32 %v605, 56
        %v613 = vadd.s32 %v605, 64
        %v614 = vadd.s32 %v605, 72
        %v615 = vadd.s32 %v605, 80
        %v616 = vadd.s32 %v605, 88
        %v617 = vadd.s32 %v605, 96
        %v618 = vadd.s32 %v605, 104
        %v619 = vadd.s32 %v605, 112
        %v620 = vadd.s32 %v605, 120
        %vm621 = vcmp.lt.s32.totalorder %v605, 0
        %v622 = vsub.s32 0, %v605
        %v623 = vsel %vm621, %v622, %v605
        %v624 = vshrl.u32 %v623, 4
        %v625 = vand.u32 %v623, 15
        %v626 = vsub.s32 0, %v625
        %v627 = vsel %vm621, %v626, %v625
        %vm628 = vcmp.lt.s32.totalorder %v606, 0
        %v629 = vsub.s32 0, %v606
        %v630 = vsel %vm628, %v629, %v606
        %v631 = vshrl.u32 %v630, 4
        %v632 = vand.u32 %v630, 15
        %v633 = vsub.s32 0, %v632
        %v634 = vsel %vm628, %v633, %v632
        %vm635 = vcmp.lt.s32.totalorder %v607, 0
        %v636 = vsub.s32 0, %v607
        %v637 = vsel %vm635, %v636, %v607
        %v638 = vshrl.u32 %v637, 4
        %v639 = vand.u32 %v637, 15
        %v640 = vsub.s32 0, %v639
        %v641 = vsel %vm635, %v640, %v639
        %vm642 = vcmp.lt.s32.totalorder %v608, 0
        %v643 = vsub.s32 0, %v608
        %v644 = vsel %vm642, %v643, %v608
        %v645 = vshrl.u32 %v644, 4
        %v646 = vand.u32 %v644, 15
        %v647 = vsub.s32 0, %v646
        %v648 = vsel %vm642, %v647, %v646
        %vm649 = vcmp.lt.s32.totalorder %v609, 0
        %v650 = vsub.s32 0, %v609
        %v651 = vsel %vm649, %v650, %v609
        %v652 = vshrl.u32 %v651, 4
        %v653 = vand.u32 %v651, 15
        %v654 = vsub.s32 0, %v653
        %v655 = vsel %vm649, %v654, %v653
        %vm656 = vcmp.lt.s32.totalorder %v610, 0
        %v657 = vsub.s32 0, %v610
        %v658 = vsel %vm656, %v657, %v610
        %v659 = vshrl.u32 %v658, 4
        %v660 = vand.u32 %v658, 15
        %v661 = vsub.s32 0, %v660
        %v662 = vsel %vm656, %v661, %v660
        %vm663 = vcmp.lt.s32.totalorder %v611, 0
        %v664 = vsub.s32 0, %v611
        %v665 = vsel %vm663, %v664, %v611
        %v666 = vshrl.u32 %v665, 4
        %v667 = vand.u32 %v665, 15
        %v668 = vsub.s32 0, %v667
        %v669 = vsel %vm663, %v668, %v667
        %vm670 = vcmp.lt.s32.totalorder %v612, 0
        %v671 = vsub.s32 0, %v612
        %v672 = vsel %vm670, %v671, %v612
        %v673 = vshrl.u32 %v672, 4
        %v674 = vand.u32 %v672, 15
        %v675 = vsub.s32 0, %v674
        %v676 = vsel %vm670, %v675, %v674
        %vm677 = vcmp.lt.s32.totalorder %v613, 0
        %v678 = vsub.s32 0, %v613
        %v679 = vsel %vm677, %v678, %v613
        %v680 = vshrl.u32 %v679, 4
        %v681 = vand.u32 %v679, 15
        %v682 = vsub.s32 0, %v681
        %v683 = vsel %vm677, %v682, %v681
        %vm684 = vcmp.lt.s32.totalorder %v614, 0
        %v685 = vsub.s32 0, %v614
        %v686 = vsel %vm684, %v685, %v614
        %v687 = vshrl.u32 %v686, 4
        %v688 = vand.u32 %v686, 15
        %v689 = vsub.s32 0, %v688
        %v690 = vsel %vm684, %v689, %v688
        %vm691 = vcmp.lt.s32.totalorder %v615, 0
        %v692 = vsub.s32 0, %v615
        %v693 = vsel %vm691, %v692, %v615
        %v694 = vshrl.u32 %v693, 4
        %v695 = vand.u32 %v693, 15
        %v696 = vsub.s32 0, %v695
        %v697 = vsel %vm691, %v696, %v695
        %vm698 = vcmp.lt.s32.totalorder %v616, 0
        %v699 = vsub.s32 0, %v616
        %v700 = vsel %vm698, %v699, %v616
        %v701 = vshrl.u32 %v700, 4
        %v702 = vand.u32 %v700, 15
        %v703 = vsub.s32 0, %v702
        %v704 = vsel %vm698, %v703, %v702
        %vm705 = vcmp.lt.s32.totalorder %v617, 0
        %v706 = vsub.s32 0, %v617
        %v707 = vsel %vm705, %v706, %v617
        %v708 = vshrl.u32 %v707, 4
        %v709 = vand.u32 %v707, 15
        %v710 = vsub.s32 0, %v709
        %v711 = vsel %vm705, %v710, %v709
        %vm712 = vcmp.lt.s32.totalorder %v618, 0
        %v713 = vsub.s32 0, %v618
        %v714 = vsel %vm712, %v713, %v618
        %v715 = vshrl.u32 %v714, 4
        %v716 = vand.u32 %v714, 15
        %v717 = vsub.s32 0, %v716
        %v718 = vsel %vm712, %v717, %v716
        %vm719 = vcmp.lt.s32.totalorder %v619, 0
        %v720 = vsub.s32 0, %v619
        %v721 = vsel %vm719, %v720, %v619
        %v722 = vshrl.u32 %v721, 4
        %v723 = vand.u32 %v721, 15
        %v724 = vsub.s32 0, %v723
        %v725 = vsel %vm719, %v724, %v723
        %vm726 = vcmp.lt.s32.totalorder %v620, 0
        %v727 = vsub.s32 0, %v620
        %v728 = vsel %vm726, %v727, %v620
        %v729 = vshrl.u32 %v728, 4
        %v730 = vand.u32 %v728, 15
        %v731 = vsub.s32 0, %v730
        %v732 = vsel %vm726, %v731, %v730
        %vm733 = vcmp.ne.s32.totalorder %v627, 0
        %vm734 = vcmp.ne.s32.totalorder %v634, 0
        %vm735 = vcmp.ne.s32.totalorder %v641, 0
        %vm736 = vcmp.ne.s32.totalorder %v648, 0
        %vm737 = vcmp.ne.s32.totalorder %v655, 0
        %vm738 = vcmp.ne.s32.totalorder %v662, 0
        %vm739 = vcmp.ne.s32.totalorder %v669, 0
        %vm740 = vcmp.ne.s32.totalorder %v676, 0
        %vm741 = vcmp.ne.s32.totalorder %v683, 0
        %vm742 = vcmp.ne.s32.totalorder %v690, 0
        %vm743 = vcmp.ne.s32.totalorder %v697, 0
        %vm744 = vcmp.ne.s32.totalorder %v704, 0
        %vm745 = vcmp.ne.s32.totalorder %v711, 0
        %vm746 = vcmp.ne.s32.totalorder %v718, 0
        %vm747 = vcmp.ne.s32.totalorder %v725, 0
        %vm748 = vcmp.ne.s32.totalorder %v732, 0
        %vm749 = vcmp.lt.s32.totalorder %v627, 0
        %vm750 = vcmp.lt.s32.totalorder %v634, 0
        %vm751 = vcmp.lt.s32.totalorder %v641, 0
        %vm752 = vcmp.lt.s32.totalorder %v648, 0
        %vm753 = vcmp.lt.s32.totalorder %v655, 0
        %vm754 = vcmp.lt.s32.totalorder %v662, 0
        %vm755 = vcmp.lt.s32.totalorder %v669, 0
        %vm756 = vcmp.lt.s32.totalorder %v676, 0
        %vm757 = vcmp.lt.s32.totalorder %v683, 0
        %vm758 = vcmp.lt.s32.totalorder %v690, 0
        %vm759 = vcmp.lt.s32.totalorder %v697, 0
        %vm760 = vcmp.lt.s32.totalorder %v704, 0
        %vm761 = vcmp.lt.s32.totalorder %v711, 0
        %vm762 = vcmp.lt.s32.totalorder %v718, 0
        %vm763 = vcmp.lt.s32.totalorder %v725, 0
        %vm764 = vcmp.lt.s32.totalorder %v732, 0
        %vm765 = vmand %vm749, %vm733
        %vm766 = vmand %vm750, %vm734
        %vm767 = vmand %vm751, %vm735
        %vm768 = vmand %vm752, %vm736
        %vm769 = vmand %vm753, %vm737
        %vm770 = vmand %vm754, %vm738
        %vm771 = vmand %vm755, %vm739
        %vm772 = vmand %vm756, %vm740
        %vm773 = vmand %vm757, %vm741
        %vm774 = vmand %vm758, %vm742
        %vm775 = vmand %vm759, %vm743
        %vm776 = vmand %vm760, %vm744
        %vm777 = vmand %vm761, %vm745
        %vm778 = vmand %vm762, %vm746
        %vm779 = vmand %vm763, %vm747
        %vm780 = vmand %vm764, %vm748
        %v781 = vadd.s32 %v627, 16
        %v782 = vadd.s32 %v634, 16
        %v783 = vadd.s32 %v641, 16
        %v784 = vadd.s32 %v648, 16
        %v785 = vadd.s32 %v655, 16
        %v786 = vadd.s32 %v662, 16
        %v787 = vadd.s32 %v669, 16
        %v788 = vadd.s32 %v676, 16
        %v789 = vadd.s32 %v683, 16
        %v790 = vadd.s32 %v690, 16
        %v791 = vadd.s32 %v697, 16
        %v792 = vadd.s32 %v704, 16
        %v793 = vadd.s32 %v711, 16
        %v794 = vadd.s32 %v718, 16
        %v795 = vadd.s32 %v725, 16
        %v796 = vadd.s32 %v732, 16
        %v797 = vsel %vm765, %v781, %v627
        %v798 = vsel %vm766, %v782, %v634
        %v799 = vsel %vm767, %v783, %v641
        %v800 = vsel %vm768, %v784, %v648
        %v801 = vsel %vm769, %v785, %v655
        %v802 = vsel %vm770, %v786, %v662
        %v803 = vsel %vm771, %v787, %v669
        %v804 = vsel %vm772, %v788, %v676
        %v805 = vsel %vm773, %v789, %v683
        %v806 = vsel %vm774, %v790, %v690
        %v807 = vsel %vm775, %v791, %v697
        %v808 = vsel %vm776, %v792, %v704
        %v809 = vsel %vm777, %v793, %v711
        %v810 = vsel %vm778, %v794, %v718
        %v811 = vsel %vm779, %v795, %v725
        %v812 = vsel %vm780, %v796, %v732
        %vm813 = vcmp.eq.s32.totalorder %v797, 0
        %vm814 = vcmp.eq.s32.totalorder %v798, 0
        %vm815 = vcmp.eq.s32.totalorder %v799, 0
        %vm816 = vcmp.eq.s32.totalorder %v800, 0
        %vm817 = vcmp.eq.s32.totalorder %v801, 0
        %vm818 = vcmp.eq.s32.totalorder %v802, 0
        %vm819 = vcmp.eq.s32.totalorder %v803, 0
        %vm820 = vcmp.eq.s32.totalorder %v804, 0
        %vm821 = vcmp.eq.s32.totalorder %v805, 0
        %vm822 = vcmp.eq.s32.totalorder %v806, 0
        %vm823 = vcmp.eq.s32.totalorder %v807, 0
        %vm824 = vcmp.eq.s32.totalorder %v808, 0
        %vm825 = vcmp.eq.s32.totalorder %v809, 0
        %vm826 = vcmp.eq.s32.totalorder %v810, 0
        %vm827 = vcmp.eq.s32.totalorder %v811, 0
        %vm828 = vcmp.eq.s32.totalorder %v812, 0
        %vm829 = vcmp.eq.s32.totalorder %v797, 15
        %vm830 = vcmp.eq.s32.totalorder %v798, 15
        %vm831 = vcmp.eq.s32.totalorder %v799, 15
        %vm832 = vcmp.eq.s32.totalorder %v800, 15
        %vm833 = vcmp.eq.s32.totalorder %v801, 15
        %vm834 = vcmp.eq.s32.totalorder %v802, 15
        %vm835 = vcmp.eq.s32.totalorder %v803, 15
        %vm836 = vcmp.eq.s32.totalorder %v804, 15
        %vm837 = vcmp.eq.s32.totalorder %v805, 15
        %vm838 = vcmp.eq.s32.totalorder %v806, 15
        %vm839 = vcmp.eq.s32.totalorder %v807, 15
        %vm840 = vcmp.eq.s32.totalorder %v808, 15
        %vm841 = vcmp.eq.s32.totalorder %v809, 15
        %vm842 = vcmp.eq.s32.totalorder %v810, 15
        %vm843 = vcmp.eq.s32.totalorder %v811, 15
        %vm844 = vcmp.eq.s32.totalorder %v812, 15
        %v845 = vrot.slane %v542, 7
        %v846 = vrot.slane %v545, 7
        %v847 = vrot.slane %v550, 7
        %v848 = vrot.slane %v553, 7
        %v849 = vrot.slane %v558, 7
        %v850 = vrot.slane %v561, 7
        %v851 = vrot.slane %v566, 7
        %v852 = vrot.slane %v569, 7
        %v853 = vrot.slane %v574, 7
        %v854 = vrot.slane %v577, 7
        %v855 = vrot.slane %v582, 7
        %v856 = vrot.slane %v585, 7
        %v857 = vrot.slane %v590, 7
        %v858 = vrot.slane %v593, 7
        %v859 = vrot.slane %v598, 7
        %v860 = vrot.slane %v601, 7
        %vm861 = vcmp.lt.s32.totalorder %v605, 1
        %v862 = vsel %vm861, %v859, %v860
        %v863 = vsel %vm861, %v858, %v859
        %v864 = vsel %vm861, %v857, %v858
        %v865 = vsel %vm861, %v856, %v857
        %v866 = vsel %vm861, %v855, %v856
        %v867 = vsel %vm861, %v854, %v855
        %v868 = vsel %vm861, %v853, %v854
        %v869 = vsel %vm861, %v852, %v853
        %v870 = vsel %vm861, %v851, %v852
        %v871 = vsel %vm861, %v850, %v851
        %v872 = vsel %vm861, %v849, %v850
        %v873 = vsel %vm861, %v848, %v849
        %v874 = vsel %vm861, %v847, %v848
        %v875 = vsel %vm861, %v846, %v847
        %v876 = vsel %vm861, %v845, %v846
        %v877 = vsel %vm861, %v860, %v845
        %v878 = vsel %vm813, 0.0, %v877
        %v879 = vsel %vm814, 0.0, %v876
        %v880 = vsel %vm815, 0.0, %v875
        %v881 = vsel %vm816, 0.0, %v874
        %v882 = vsel %vm817, 0.0, %v873
        %v883 = vsel %vm818, 0.0, %v872
        %v884 = vsel %vm819, 0.0, %v871
        %v885 = vsel %vm820, 0.0, %v870
        %v886 = vsel %vm821, 0.0, %v869
        %v887 = vsel %vm822, 0.0, %v868
        %v888 = vsel %vm823, 0.0, %v867
        %v889 = vsel %vm824, 0.0, %v866
        %v890 = vsel %vm825, 0.0, %v865
        %v891 = vsel %vm826, 0.0, %v864
        %v892 = vsel %vm827, 0.0, %v863
        %v893 = vsel %vm828, 0.0, %v862
        %v894 = vrot.slane %v542, 1
        %v895 = vrot.slane %v545, 1
        %v896 = vrot.slane %v550, 1
        %v897 = vrot.slane %v553, 1
        %v898 = vrot.slane %v558, 1
        %v899 = vrot.slane %v561, 1
        %v900 = vrot.slane %v566, 1
        %v901 = vrot.slane %v569, 1
        %v902 = vrot.slane %v574, 1
        %v903 = vrot.slane %v577, 1
        %v904 = vrot.slane %v582, 1
        %v905 = vrot.slane %v585, 1
        %v906 = vrot.slane %v590, 1
        %v907 = vrot.slane %v593, 1
        %v908 = vrot.slane %v598, 1
        %v909 = vrot.slane %v601, 1
        %vm910 = vcmp.lt.s32.totalorder %v605, 7
        %v911 = vsel %vm910, %v908, %v909
        %v912 = vsel %vm910, %v907, %v908
        %v913 = vsel %vm910, %v906, %v907
        %v914 = vsel %vm910, %v905, %v906
        %v915 = vsel %vm910, %v904, %v905
        %v916 = vsel %vm910, %v903, %v904
        %v917 = vsel %vm910, %v902, %v903
        %v918 = vsel %vm910, %v901, %v902
        %v919 = vsel %vm910, %v900, %v901
        %v920 = vsel %vm910, %v899, %v900
        %v921 = vsel %vm910, %v898, %v899
        %v922 = vsel %vm910, %v897, %v898
        %v923 = vsel %vm910, %v896, %v897
        %v924 = vsel %vm910, %v895, %v896
        %v925 = vsel %vm910, %v894, %v895
        %v926 = vsel %vm910, %v909, %v894
        %v927 = vsel %vm829, 0.0, %v925
        %v928 = vsel %vm830, 0.0, %v924
        %v929 = vsel %vm831, 0.0, %v923
        %v930 = vsel %vm832, 0.0, %v922
        %v931 = vsel %vm833, 0.0, %v921
        %v932 = vsel %vm834, 0.0, %v920
        %v933 = vsel %vm835, 0.0, %v919
        %v934 = vsel %vm836, 0.0, %v918
        %v935 = vsel %vm837, 0.0, %v917
        %v936 = vsel %vm838, 0.0, %v916
        %v937 = vsel %vm839, 0.0, %v915
        %v938 = vsel %vm840, 0.0, %v914
        %v939 = vsel %vm841, 0.0, %v913
        %v940 = vsel %vm842, 0.0, %v912
        %v941 = vsel %vm843, 0.0, %v911
        %v942 = vsel %vm844, 0.0, %v926
        %v943 = vpack.c.bf16 %v879, %v878
        %v944 = vpack.c.bf16 %v545, %v542
        %v945 = vpack.c.bf16 %v928, %v927
        %v946 = vpack.c.bf16 %v881, %v880
        %v947 = vpack.c.bf16 %v553, %v550
        %v948 = vpack.c.bf16 %v930, %v929
        %v949 = vpack.c.bf16 %v883, %v882
        %v950 = vpack.c.bf16 %v561, %v558
        %v951 = vpack.c.bf16 %v932, %v931
        %v952 = vpack.c.bf16 %v885, %v884
        %v953 = vpack.c.bf16 %v569, %v566
        %v954 = vpack.c.bf16 %v934, %v933
        %v955 = vpack.c.bf16 %v887, %v886
        %v956 = vpack.c.bf16 %v577, %v574
        %v957 = vpack.c.bf16 %v936, %v935
        %v958 = vpack.c.bf16 %v889, %v888
        %v959 = vpack.c.bf16 %v585, %v582
        %v960 = vpack.c.bf16 %v938, %v937
        %v961 = vpack.c.bf16 %v891, %v890
        %v962 = vpack.c.bf16 %v593, %v590
        %v963 = vpack.c.bf16 %v940, %v939
        %v964 = vpack.c.bf16 %v893, %v892
        %v965 = vpack.c.bf16 %v601, %v598
        %v966 = vpack.c.bf16 %v942, %v941
        %v967 = vld [vmem:[%s2] sm:$0xf]
        %v968 = vld [vmem:[%s2 + $0x4] sm:$0xf]
        %v969 = vld [vmem:[%s2 + $0x8] sm:$0xf]
        %v970 = vld [vmem:[%s2 + $0xc] sm:$0xf]
        %v971 = vld [vmem:[%s2 + $0x10] sm:$0xf]
        %v972 = vld [vmem:[%s2 + $0x14] sm:$0xf]
        %v973 = vld [vmem:[%s2 + $0x18] sm:$0xf]
        %v974 = vld [vmem:[%s2 + $0x1c] sm:$0xf]
        %v975 = vld [vmem:[%s2 + $0x20] sm:$0xf]
        %v976 = vld [vmem:[%s2 + $0x24] sm:$0xf]
        %v977 = vld [vmem:[%s2 + $0x28] sm:$0xf]
        %v978 = vld [vmem:[%s2 + $0x2c] sm:$0xf]
        %v979 = vld [vmem:[%s2 + $0x30] sm:$0xf]
        %v980 = vld [vmem:[%s2 + $0x34] sm:$0xf]
        %v981 = vld [vmem:[%s2 + $0x38] sm:$0xf]
        %v982 = vld [vmem:[%s2 + $0x3c] sm:$0xf]
        %v983 = vld [vmem:[%s2 + $0x40] sm:$0xf]
        %v984 = vld [vmem:[%s2 + $0x44] sm:$0xf]
        %v985 = vld [vmem:[%s2 + $0x48] sm:$0xf]
        %v986 = vld [vmem:[%s2 + $0x4c] sm:$0xf]
        %v987 = vld [vmem:[%s2 + $0x50] sm:$0xf]
        %v988 = vld [vmem:[%s2 + $0x54] sm:$0xf]
        %v989 = vld [vmem:[%s2 + $0x58] sm:$0xf]
        %v990 = vld [vmem:[%s2 + $0x5c] sm:$0xf]
        %v991 = vld [vmem:[%s2 + $0x60] sm:$0xf]
        %v992 = vld [vmem:[%s2 + $0x64] sm:$0xf]
        %v993 = vld [vmem:[%s2 + $0x68] sm:$0xf]
        %v994 = vld [vmem:[%s2 + $0x6c] sm:$0xf]
        %v995 = vld [vmem:[%s2 + $0x70] sm:$0xf]
        %v996 = vld [vmem:[%s2 + $0x74] sm:$0xf]
        %v997 = vld [vmem:[%s2 + $0x78] sm:$0xf]
        %v998 = vld [vmem:[%s2 + $0x7c] sm:$0xf]
        %v999 = vld [vmem:[%s2 + $0x80] sm:$0xf]
        %v1000 = vld [vmem:[%s2 + $0x84] sm:$0xf]
        %v1001 = vld [vmem:[%s2 + $0x88] sm:$0xf]
        %v1002 = vld [vmem:[%s2 + $0x8c] sm:$0xf]
        %v1003 = vld [vmem:[%s2 + $0x90] sm:$0xf]
        %v1004 = vld [vmem:[%s2 + $0x94] sm:$0xf]
        %v1005 = vld [vmem:[%s2 + $0x98] sm:$0xf]
        %v1006 = vld [vmem:[%s2 + $0x9c] sm:$0xf]
        %v1007 = vld [vmem:[%s2 + $0xa0] sm:$0xf]
        %v1008 = vld [vmem:[%s2 + $0xa4] sm:$0xf]
        %v1009 = vld [vmem:[%s2 + $0xa8] sm:$0xf]
        %v1010 = vld [vmem:[%s2 + $0xac] sm:$0xf]
        %v1011 = vld [vmem:[%s2 + $0xb0] sm:$0xf]
        %v1012 = vld [vmem:[%s2 + $0xb4] sm:$0xf]
        %v1013 = vld [vmem:[%s2 + $0xb8] sm:$0xf]
        %v1014 = vld [vmem:[%s2 + $0xbc] sm:$0xf]
        %v1015 = vld [vmem:[%s3] sm:$0x1]
        %v1017 = vlaneseq
        %v1018 = vshrl.u32 %v1017, 7
        %v1019 = vsub.s32 0, %v1018
        %v1020 = vrot.slane %v1015, %v1019
        %v1070 = vunpack.c.l.b16 %v967
        %v1071 = vunpack.c.l.b16 %v968
        %v1072 = vunpack.c.l.b16 %v969
        %v1073 = vunpack.c.l.b16 %v970
        %v1074 = vunpack.c.l.b16 %v971
        %v1075 = vunpack.c.l.b16 %v972
        %v1076 = vunpack.c.l.b16 %v973
        %v1077 = vunpack.c.l.b16 %v974
        %v1078 = vunpack.c.l.b16 %v975
        %v1079 = vunpack.c.l.b16 %v976
        %v1080 = vunpack.c.l.b16 %v977
        %v1081 = vunpack.c.l.b16 %v978
        %v1082 = vunpack.c.l.b16 %v979
        %v1083 = vunpack.c.l.b16 %v980
        %v1084 = vunpack.c.l.b16 %v981
        %v1085 = vunpack.c.l.b16 %v982
        %v1086 = vunpack.c.l.b16 %v983
        %v1087 = vunpack.c.l.b16 %v984
        %v1088 = vunpack.c.l.b16 %v985
        %v1089 = vunpack.c.l.b16 %v986
        %v1090 = vunpack.c.l.b16 %v987
        %v1091 = vunpack.c.l.b16 %v988
        %v1092 = vunpack.c.l.b16 %v989
        %v1093 = vunpack.c.l.b16 %v990
        %v1094 = vunpack.c.l.b16 %v991
        %v1095 = vunpack.c.l.b16 %v992
        %v1096 = vunpack.c.l.b16 %v993
        %v1097 = vunpack.c.l.b16 %v994
        %v1098 = vunpack.c.l.b16 %v995
        %v1099 = vunpack.c.l.b16 %v996
        %v1100 = vunpack.c.l.b16 %v997
        %v1101 = vunpack.c.l.b16 %v998
        %v1102 = vunpack.c.l.b16 %v999
        %v1103 = vunpack.c.l.b16 %v1000
        %v1104 = vunpack.c.l.b16 %v1001
        %v1105 = vunpack.c.l.b16 %v1002
        %v1106 = vunpack.c.l.b16 %v1003
        %v1107 = vunpack.c.l.b16 %v1004
        %v1108 = vunpack.c.l.b16 %v1005
        %v1109 = vunpack.c.l.b16 %v1006
        %v1110 = vunpack.c.l.b16 %v1007
        %v1111 = vunpack.c.l.b16 %v1008
        %v1112 = vunpack.c.l.b16 %v1009
        %v1113 = vunpack.c.l.b16 %v1010
        %v1114 = vunpack.c.l.b16 %v1011
        %v1115 = vunpack.c.l.b16 %v1012
        %v1116 = vunpack.c.l.b16 %v1013
        %v1117 = vunpack.c.l.b16 %v1014
        %v1118 = vpack.c.b16 %v1071, %v1070
        %v1119 = vpack.c.b16 %v1073, %v1072
        %v1120 = vpack.c.b16 %v1075, %v1074
        %v1121 = vpack.c.b16 %v1077, %v1076
        %v1122 = vpack.c.b16 %v1079, %v1078
        %v1123 = vpack.c.b16 %v1081, %v1080
        %v1124 = vpack.c.b16 %v1083, %v1082
        %v1125 = vpack.c.b16 %v1085, %v1084
        %v1126 = vpack.c.b16 %v1087, %v1086
        %v1127 = vpack.c.b16 %v1089, %v1088
        %v1128 = vpack.c.b16 %v1091, %v1090
        %v1129 = vpack.c.b16 %v1093, %v1092
        %v1130 = vpack.c.b16 %v1095, %v1094
        %v1131 = vpack.c.b16 %v1097, %v1096
        %v1132 = vpack.c.b16 %v1099, %v1098
        %v1133 = vpack.c.b16 %v1101, %v1100
        %v1134 = vpack.c.b16 %v1103, %v1102
        %v1135 = vpack.c.b16 %v1105, %v1104
        %v1136 = vpack.c.b16 %v1107, %v1106
        %v1137 = vpack.c.b16 %v1109, %v1108
        %v1138 = vpack.c.b16 %v1111, %v1110
        %v1139 = vpack.c.b16 %v1113, %v1112
        %v1140 = vpack.c.b16 %v1115, %v1114
        %v1141 = vpack.c.b16 %v1117, %v1116
        %1166 = vmatprep.subr.bf16.mxu0 0
        %1167 = vmatpush1.bf16.msra.mxu0 %v1125
        %1168 = vmatprep.subr.bf16.mxu0 0
        %1169 = vmatpush1.bf16.msra.mxu0 %v1124
        %1170 = vmatprep.subr.bf16.mxu0 0
        %1171 = vmatpush1.bf16.msra.mxu0 %v1123
        %1172 = vmatprep.subr.bf16.mxu0 0
        %1173 = vmatpush1.bf16.msra.mxu0 %v1122
        %1174 = vmatprep.subr.bf16.mxu0 0
        %1175 = vmatpush1.bf16.msra.mxu0 %v1121
        %1176 = vmatprep.subr.bf16.mxu0 0
        %1177 = vmatpush1.bf16.msra.mxu0 %v1120
        %1178 = vmatprep.subr.bf16.mxu0 0
        %1179 = vmatpush1.bf16.msra.mxu0 %v1119
        %1180 = vmatprep.subr.bf16.mxu0 0
        %1181 = vmatpush1.bf16.msra.mxu0 %v1118
        %1182 = vmatprep.subr.bf16.mxu0 0
        %1183 = vmatpush2.bf16.msra.mxu0 %v1133
        %1184 = vmatprep.subr.bf16.mxu0 0
        %1185 = vmatpush2.bf16.msra.mxu0 %v1132
        %1186 = vmatprep.subr.bf16.mxu0 0
        %1187 = vmatpush2.bf16.msra.mxu0 %v1131
        %1188 = vmatprep.subr.bf16.mxu0 0
        %1189 = vmatpush2.bf16.msra.mxu0 %v1130
        %1190 = vmatprep.subr.bf16.mxu0 0
        %1191 = vmatpush2.bf16.msra.mxu0 %v1129
        %1192 = vmatprep.subr.bf16.mxu0 0
        %1193 = vmatpush2.bf16.msra.mxu0 %v1128
        %1194 = vmatprep.subr.bf16.mxu0 0
        %1195 = vmatpush2.bf16.msra.mxu0 %v1127
        %1196 = vmatprep.subr.bf16.mxu0 0
        %1197 = vmatpush2.bf16.msra.mxu0 %v1126
        %1198 = vmatprep.mubr.bf16.mxu0 %v944
        %1199 = vmatmul.mubr.bf16.gmra.mxu0 %v943
        %v1200 = vpop.f32.mrf.mxu0
        %v1201 = vadd.f32 %v1020, %v1200
        %v1202 = vpop.f32.mrf.mxu0
        %v1203 = vpop.f32.mrf.mxu0
        %v1204 = vadd.f32 %v1020, %v1203
        %v1205 = vpop.f32.mrf.mxu0
        %1206 = vmatprep.mubr.bf16.mxu0 %v947
        %1207 = vmatmul.mubr.bf16.gmra.mxu0 %v946
        %v1208 = vpop.f32.mrf.mxu0
        %v1209 = vadd.f32 %v1020, %v1208
        %v1210 = vpop.f32.mrf.mxu0
        %v1211 = vpop.f32.mrf.mxu0
        %v1212 = vadd.f32 %v1020, %v1211
        %v1213 = vpop.f32.mrf.mxu0
        %1214 = vmatprep.mubr.bf16.mxu0 %v950
        %1215 = vmatmul.mubr.bf16.gmra.mxu0 %v949
        %v1216 = vpop.f32.mrf.mxu0
        %v1217 = vadd.f32 %v1020, %v1216
        %v1218 = vpop.f32.mrf.mxu0
        %v1219 = vpop.f32.mrf.mxu0
        %v1220 = vadd.f32 %v1020, %v1219
        %v1221 = vpop.f32.mrf.mxu0
        %1222 = vmatprep.mubr.bf16.mxu0 %v953
        %1223 = vmatmul.mubr.bf16.gmra.mxu0 %v952
        %v1224 = vpop.f32.mrf.mxu0
        %v1225 = vadd.f32 %v1020, %v1224
        %v1226 = vpop.f32.mrf.mxu0
        %v1227 = vpop.f32.mrf.mxu0
        %v1228 = vadd.f32 %v1020, %v1227
        %v1229 = vpop.f32.mrf.mxu0
        %1230 = vmatprep.mubr.bf16.mxu0 %v956
        %1231 = vmatmul.mubr.bf16.gmra.mxu0 %v955
        %v1232 = vpop.f32.mrf.mxu0
        %v1233 = vadd.f32 %v1020, %v1232
        %v1234 = vpop.f32.mrf.mxu0
        %v1235 = vpop.f32.mrf.mxu0
        %v1236 = vadd.f32 %v1020, %v1235
        %v1237 = vpop.f32.mrf.mxu0
        %1238 = vmatprep.mubr.bf16.mxu0 %v959
        %1239 = vmatmul.mubr.bf16.gmra.mxu0 %v958
        %v1240 = vpop.f32.mrf.mxu0
        %v1241 = vadd.f32 %v1020, %v1240
        %v1242 = vpop.f32.mrf.mxu0
        %v1243 = vpop.f32.mrf.mxu0
        %v1244 = vadd.f32 %v1020, %v1243
        %v1245 = vpop.f32.mrf.mxu0
        %1246 = vmatprep.mubr.bf16.mxu0 %v962
        %1247 = vmatmul.mubr.bf16.gmra.mxu0 %v961
        %v1248 = vpop.f32.mrf.mxu0
        %v1249 = vadd.f32 %v1020, %v1248
        %v1250 = vpop.f32.mrf.mxu0
        %v1251 = vpop.f32.mrf.mxu0
        %v1252 = vadd.f32 %v1020, %v1251
        %v1253 = vpop.f32.mrf.mxu0
        %1254 = vmatprep.mubr.bf16.mxu0 %v965
        %1255 = vmatmul.mubr.bf16.gmra.mxu0 %v964
        %v1256 = vpop.f32.mrf.mxu0
        %v1257 = vadd.f32 %v1020, %v1256
        %v1258 = vpop.f32.mrf.mxu0
        %v1259 = vpop.f32.mrf.mxu0
        %v1260 = vadd.f32 %v1020, %v1259
        %v1261 = vpop.f32.mrf.mxu0
        %1262 = vdwg.mxu0
        %1263 = vmatprep.subr.bf16.mxu0 0
        %1264 = vmatpush1.bf16.msra.mxu0 %v1141
        %1265 = vmatprep.subr.bf16.mxu0 0
        %1266 = vmatpush1.bf16.msra.mxu0 %v1140
        %1267 = vmatprep.subr.bf16.mxu0 0
        %1268 = vmatpush1.bf16.msra.mxu0 %v1139
        %1269 = vmatprep.subr.bf16.mxu0 0
        %1270 = vmatpush1.bf16.msra.mxu0 %v1138
        %1271 = vmatprep.subr.bf16.mxu0 0
        %1272 = vmatpush1.bf16.msra.mxu0 %v1137
        %1273 = vmatprep.subr.bf16.mxu0 0
        %1274 = vmatpush1.bf16.msra.mxu0 %v1136
        %1275 = vmatprep.subr.bf16.mxu0 0
        %1276 = vmatpush1.bf16.msra.mxu0 %v1135
        %1277 = vmatprep.subr.bf16.mxu0 0
        %1278 = vmatpush1.bf16.msra.mxu0 %v1134
        %1279 = vmatprep.subr.bf16.mxu0 0
        %1280 = vmatpush2.bf16.msra.mxu0 0
        %1281 = vmatprep.subr.bf16.mxu0 0
        %1282 = vmatpush2.bf16.msra.mxu0 0
        %1283 = vmatprep.subr.bf16.mxu0 0
        %1284 = vmatpush2.bf16.msra.mxu0 0
        %1285 = vmatprep.subr.bf16.mxu0 0
        %1286 = vmatpush2.bf16.msra.mxu0 0
        %1287 = vmatprep.subr.bf16.mxu0 0
        %1288 = vmatpush2.bf16.msra.mxu0 0
        %1289 = vmatprep.subr.bf16.mxu0 0
        %1290 = vmatpush2.bf16.msra.mxu0 0
        %1291 = vmatprep.subr.bf16.mxu0 0
        %1292 = vmatpush2.bf16.msra.mxu0 0
        %1293 = vmatprep.subr.bf16.mxu0 0
        %1294 = vmatpush2.bf16.msra.mxu0 0
        %1295 = vmatprep.mubr.bf16.mxu0 0
        %1296 = vmatmul.mubr.bf16.gmra.mxu0 %v945
        %v1297 = vpop.f32.mrf.mxu0
        %v1298 = vadd.f32 %v1201, %v1297
        %v1299 = vpop.f32.mrf.mxu0
        %v1300 = vpop.f32.mrf.mxu0
        %v1301 = vadd.f32 %v1204, %v1300
        %v1302 = vpop.f32.mrf.mxu0
        %1303 = vmatprep.mubr.bf16.mxu0 0
        %1304 = vmatmul.mubr.bf16.gmra.mxu0 %v948
        %v1305 = vpop.f32.mrf.mxu0
        %v1306 = vadd.f32 %v1209, %v1305
        %v1307 = vpop.f32.mrf.mxu0
        %v1308 = vpop.f32.mrf.mxu0
        %v1309 = vadd.f32 %v1212, %v1308
        %v1310 = vpop.f32.mrf.mxu0
        %1311 = vmatprep.mubr.bf16.mxu0 0
        %1312 = vmatmul.mubr.bf16.gmra.mxu0 %v951
        %v1313 = vpop.f32.mrf.mxu0
        %v1314 = vadd.f32 %v1217, %v1313
        %v1315 = vpop.f32.mrf.mxu0
        %v1316 = vpop.f32.mrf.mxu0
        %v1317 = vadd.f32 %v1220, %v1316
        %v1318 = vpop.f32.mrf.mxu0
        %1319 = vmatprep.mubr.bf16.mxu0 0
        %1320 = vmatmul.mubr.bf16.gmra.mxu0 %v954
        %v1321 = vpop.f32.mrf.mxu0
        %v1322 = vadd.f32 %v1225, %v1321
        %v1323 = vpop.f32.mrf.mxu0
        %v1324 = vpop.f32.mrf.mxu0
        %v1325 = vadd.f32 %v1228, %v1324
        %v1326 = vpop.f32.mrf.mxu0
        %1327 = vmatprep.mubr.bf16.mxu0 0
        %1328 = vmatmul.mubr.bf16.gmra.mxu0 %v957
        %v1329 = vpop.f32.mrf.mxu0
        %v1330 = vadd.f32 %v1233, %v1329
        %v1331 = vpop.f32.mrf.mxu0
        %v1332 = vpop.f32.mrf.mxu0
        %v1333 = vadd.f32 %v1236, %v1332
        %v1334 = vpop.f32.mrf.mxu0
        %1335 = vmatprep.mubr.bf16.mxu0 0
        %1336 = vmatmul.mubr.bf16.gmra.mxu0 %v960
        %v1337 = vpop.f32.mrf.mxu0
        %v1338 = vadd.f32 %v1241, %v1337
        %v1339 = vpop.f32.mrf.mxu0
        %v1340 = vpop.f32.mrf.mxu0
        %v1341 = vadd.f32 %v1244, %v1340
        %v1342 = vpop.f32.mrf.mxu0
        %1343 = vmatprep.mubr.bf16.mxu0 0
        %1344 = vmatmul.mubr.bf16.gmra.mxu0 %v963
        %v1345 = vpop.f32.mrf.mxu0
        %v1346 = vadd.f32 %v1249, %v1345
        %v1347 = vpop.f32.mrf.mxu0
        %v1348 = vpop.f32.mrf.mxu0
        %v1349 = vadd.f32 %v1252, %v1348
        %v1350 = vpop.f32.mrf.mxu0
        %1351 = vmatprep.mubr.bf16.mxu0 0
        %1352 = vmatmul.mubr.bf16.gmra.mxu0 %v966
        %v1353 = vpop.f32.mrf.mxu0
        %v1354 = vadd.f32 %v1257, %v1353
        %v1355 = vpop.f32.mrf.mxu0
        %v1356 = vpop.f32.mrf.mxu0
        %v1357 = vadd.f32 %v1260, %v1356
        %v1358 = vpop.f32.mrf.mxu0
        %1359 = vdwg.mxu0
        %v1360 = vmax.f32 %v1298, 0.0
        %v1361 = vmax.f32 %v1301, 0.0
        %v1362 = vmax.f32 %v1306, 0.0
        %v1363 = vmax.f32 %v1309, 0.0
        %v1364 = vmax.f32 %v1314, 0.0
        %v1365 = vmax.f32 %v1317, 0.0
        %v1366 = vmax.f32 %v1322, 0.0
        %v1367 = vmax.f32 %v1325, 0.0
        %v1368 = vmax.f32 %v1330, 0.0
        %v1369 = vmax.f32 %v1333, 0.0
        %v1370 = vmax.f32 %v1338, 0.0
        %v1371 = vmax.f32 %v1341, 0.0
        %v1372 = vmax.f32 %v1346, 0.0
        %v1373 = vmax.f32 %v1349, 0.0
        %v1374 = vmax.f32 %v1354, 0.0
        %v1375 = vmax.f32 %v1357, 0.0
        %v1376 = vrot.slane %v1360, 7
        %v1377 = vrot.slane %v1361, 7
        %v1378 = vrot.slane %v1362, 7
        %v1379 = vrot.slane %v1363, 7
        %v1380 = vrot.slane %v1364, 7
        %v1381 = vrot.slane %v1365, 7
        %v1382 = vrot.slane %v1366, 7
        %v1383 = vrot.slane %v1367, 7
        %v1384 = vrot.slane %v1368, 7
        %v1385 = vrot.slane %v1369, 7
        %v1386 = vrot.slane %v1370, 7
        %v1387 = vrot.slane %v1371, 7
        %v1388 = vrot.slane %v1372, 7
        %v1389 = vrot.slane %v1373, 7
        %v1390 = vrot.slane %v1374, 7
        %v1391 = vrot.slane %v1375, 7
        %v1392 = vsel %vm861, %v1390, %v1391
        %v1393 = vsel %vm861, %v1389, %v1390
        %v1394 = vsel %vm861, %v1388, %v1389
        %v1395 = vsel %vm861, %v1387, %v1388
        %v1396 = vsel %vm861, %v1386, %v1387
        %v1397 = vsel %vm861, %v1385, %v1386
        %v1398 = vsel %vm861, %v1384, %v1385
        %v1399 = vsel %vm861, %v1383, %v1384
        %v1400 = vsel %vm861, %v1382, %v1383
        %v1401 = vsel %vm861, %v1381, %v1382
        %v1402 = vsel %vm861, %v1380, %v1381
        %v1403 = vsel %vm861, %v1379, %v1380
        %v1404 = vsel %vm861, %v1378, %v1379
        %v1405 = vsel %vm861, %v1377, %v1378
        %v1406 = vsel %vm861, %v1376, %v1377
        %v1407 = vsel %vm861, %v1391, %v1376
        %v1408 = vsel %vm813, 0.0, %v1407
        %v1409 = vsel %vm814, 0.0, %v1406
        %v1410 = vsel %vm815, 0.0, %v1405
        %v1411 = vsel %vm816, 0.0, %v1404
        %v1412 = vsel %vm817, 0.0, %v1403
        %v1413 = vsel %vm818, 0.0, %v1402
        %v1414 = vsel %vm819, 0.0, %v1401
        %v1415 = vsel %vm820, 0.0, %v1400
        %v1416 = vsel %vm821, 0.0, %v1399
        %v1417 = vsel %vm822, 0.0, %v1398
        %v1418 = vsel %vm823, 0.0, %v1397
        %v1419 = vsel %vm824, 0.0, %v1396
        %v1420 = vsel %vm825, 0.0, %v1395
        %v1421 = vsel %vm826, 0.0, %v1394
        %v1422 = vsel %vm827, 0.0, %v1393
        %v1423 = vsel %vm828, 0.0, %v1392
        %v1424 = vrot.slane %v1360, 1
        %v1425 = vrot.slane %v1361, 1
        %v1426 = vrot.slane %v1362, 1
        %v1427 = vrot.slane %v1363, 1
        %v1428 = vrot.slane %v1364, 1
        %v1429 = vrot.slane %v1365, 1
        %v1430 = vrot.slane %v1366, 1
        %v1431 = vrot.slane %v1367, 1
        %v1432 = vrot.slane %v1368, 1
        %v1433 = vrot.slane %v1369, 1
        %v1434 = vrot.slane %v1370, 1
        %v1435 = vrot.slane %v1371, 1
        %v1436 = vrot.slane %v1372, 1
        %v1437 = vrot.slane %v1373, 1
        %v1438 = vrot.slane %v1374, 1
        %v1439 = vrot.slane %v1375, 1
        %v1440 = vsel %vm910, %v1438, %v1439
        %v1441 = vsel %vm910, %v1437, %v1438
        %v1442 = vsel %vm910, %v1436, %v1437
        %v1443 = vsel %vm910, %v1435, %v1436
        %v1444 = vsel %vm910, %v1434, %v1435
        %v1445 = vsel %vm910, %v1433, %v1434
        %v1446 = vsel %vm910, %v1432, %v1433
        %v1447 = vsel %vm910, %v1431, %v1432
        %v1448 = vsel %vm910, %v1430, %v1431
        %v1449 = vsel %vm910, %v1429, %v1430
        %v1450 = vsel %vm910, %v1428, %v1429
        %v1451 = vsel %vm910, %v1427, %v1428
        %v1452 = vsel %vm910, %v1426, %v1427
        %v1453 = vsel %vm910, %v1425, %v1426
        %v1454 = vsel %vm910, %v1424, %v1425
        %v1455 = vsel %vm910, %v1439, %v1424
        %v1456 = vsel %vm829, 0.0, %v1454
        %v1457 = vsel %vm830, 0.0, %v1453
        %v1458 = vsel %vm831, 0.0, %v1452
        %v1459 = vsel %vm832, 0.0, %v1451
        %v1460 = vsel %vm833, 0.0, %v1450
        %v1461 = vsel %vm834, 0.0, %v1449
        %v1462 = vsel %vm835, 0.0, %v1448
        %v1463 = vsel %vm836, 0.0, %v1447
        %v1464 = vsel %vm837, 0.0, %v1446
        %v1465 = vsel %vm838, 0.0, %v1445
        %v1466 = vsel %vm839, 0.0, %v1444
        %v1467 = vsel %vm840, 0.0, %v1443
        %v1468 = vsel %vm841, 0.0, %v1442
        %v1469 = vsel %vm842, 0.0, %v1441
        %v1470 = vsel %vm843, 0.0, %v1440
        %v1471 = vsel %vm844, 0.0, %v1455
        %v1472 = vpack.c.bf16 %v1409, %v1408
        %v1473 = vpack.c.bf16 %v1361, %v1360
        %v1474 = vpack.c.bf16 %v1457, %v1456
        %v1475 = vpack.c.bf16 %v1411, %v1410
        %v1476 = vpack.c.bf16 %v1363, %v1362
        %v1477 = vpack.c.bf16 %v1459, %v1458
        %v1478 = vpack.c.bf16 %v1413, %v1412
        %v1479 = vpack.c.bf16 %v1365, %v1364
        %v1480 = vpack.c.bf16 %v1461, %v1460
        %v1481 = vpack.c.bf16 %v1415, %v1414
        %v1482 = vpack.c.bf16 %v1367, %v1366
        %v1483 = vpack.c.bf16 %v1463, %v1462
        %v1484 = vpack.c.bf16 %v1417, %v1416
        %v1485 = vpack.c.bf16 %v1369, %v1368
        %v1486 = vpack.c.bf16 %v1465, %v1464
        %v1487 = vpack.c.bf16 %v1419, %v1418
        %v1488 = vpack.c.bf16 %v1371, %v1370
        %v1489 = vpack.c.bf16 %v1467, %v1466
        %v1490 = vpack.c.bf16 %v1421, %v1420
        %v1491 = vpack.c.bf16 %v1373, %v1372
        %v1492 = vpack.c.bf16 %v1469, %v1468
        %v1493 = vpack.c.bf16 %v1423, %v1422
        %v1494 = vpack.c.bf16 %v1375, %v1374
        %v1495 = vpack.c.bf16 %v1471, %v1470
        %v1496 = vld [vmem:[#allocation2] sm:$0xf]
        %v1497 = vld [vmem:[#allocation2 + $0x4] sm:$0xf]
        %v1498 = vld [vmem:[#allocation2 + $0x8] sm:$0xf]
        %v1499 = vld [vmem:[#allocation2 + $0xc] sm:$0xf]
        %v1500 = vld [vmem:[#allocation2 + $0x10] sm:$0xf]
        %v1501 = vld [vmem:[#allocation2 + $0x14] sm:$0xf]
        %v1502 = vld [vmem:[#allocation2 + $0x18] sm:$0xf]
        %v1503 = vld [vmem:[#allocation2 + $0x1c] sm:$0xf]
        %v1504 = vld [vmem:[#allocation2 + $0x20] sm:$0xf]
        %v1505 = vld [vmem:[#allocation2 + $0x24] sm:$0xf]
        %v1506 = vld [vmem:[#allocation2 + $0x28] sm:$0xf]
        %v1507 = vld [vmem:[#allocation2 + $0x2c] sm:$0xf]
        %v1508 = vld [vmem:[#allocation2 + $0x30] sm:$0xf]
        %v1509 = vld [vmem:[#allocation2 + $0x34] sm:$0xf]
        %v1510 = vld [vmem:[#allocation2 + $0x38] sm:$0xf]
        %v1511 = vld [vmem:[#allocation2 + $0x3c] sm:$0xf]
        %v1512 = vld [vmem:[#allocation2 + $0x40] sm:$0xf]
        %v1513 = vld [vmem:[#allocation2 + $0x44] sm:$0xf]
        %v1514 = vld [vmem:[#allocation2 + $0x48] sm:$0xf]
        %v1515 = vld [vmem:[#allocation2 + $0x4c] sm:$0xf]
        %v1516 = vld [vmem:[#allocation2 + $0x50] sm:$0xf]
        %v1517 = vld [vmem:[#allocation2 + $0x54] sm:$0xf]
        %v1518 = vld [vmem:[#allocation2 + $0x58] sm:$0xf]
        %v1519 = vld [vmem:[#allocation2 + $0x5c] sm:$0xf]
        %v1520 = vld [vmem:[#allocation2 + $0x60] sm:$0xf]
        %v1521 = vld [vmem:[#allocation2 + $0x64] sm:$0xf]
        %v1522 = vld [vmem:[#allocation2 + $0x68] sm:$0xf]
        %v1523 = vld [vmem:[#allocation2 + $0x6c] sm:$0xf]
        %v1524 = vld [vmem:[#allocation2 + $0x70] sm:$0xf]
        %v1525 = vld [vmem:[#allocation2 + $0x74] sm:$0xf]
        %v1526 = vld [vmem:[#allocation2 + $0x78] sm:$0xf]
        %v1527 = vld [vmem:[#allocation2 + $0x7c] sm:$0xf]
        %v1528 = vld [vmem:[#allocation2 + $0x80] sm:$0xf]
        %v1529 = vld [vmem:[#allocation2 + $0x84] sm:$0xf]
        %v1530 = vld [vmem:[#allocation2 + $0x88] sm:$0xf]
        %v1531 = vld [vmem:[#allocation2 + $0x8c] sm:$0xf]
        %v1532 = vld [vmem:[#allocation2 + $0x90] sm:$0xf]
        %v1533 = vld [vmem:[#allocation2 + $0x94] sm:$0xf]
        %v1534 = vld [vmem:[#allocation2 + $0x98] sm:$0xf]
        %v1535 = vld [vmem:[#allocation2 + $0x9c] sm:$0xf]
        %v1536 = vld [vmem:[#allocation2 + $0xa0] sm:$0xf]
        %v1537 = vld [vmem:[#allocation2 + $0xa4] sm:$0xf]
        %v1538 = vld [vmem:[#allocation2 + $0xa8] sm:$0xf]
        %v1539 = vld [vmem:[#allocation2 + $0xac] sm:$0xf]
        %v1540 = vld [vmem:[#allocation2 + $0xb0] sm:$0xf]
        %v1541 = vld [vmem:[#allocation2 + $0xb4] sm:$0xf]
        %v1542 = vld [vmem:[#allocation2 + $0xb8] sm:$0xf]
        %v1543 = vld [vmem:[#allocation2 + $0xbc] sm:$0xf]
        %v1544 = vld [vmem:[%s5] sm:$0x1]
        %v1546 = vlaneseq
        %v1547 = vshrl.u32 %v1546, 7
        %v1548 = vsub.s32 0, %v1547
        %v1549 = vrot.slane %v1544, %v1548
        %v1599 = vunpack.c.l.b16 %v1496
        %v1600 = vunpack.c.l.b16 %v1497
        %v1601 = vunpack.c.l.b16 %v1498
        %v1602 = vunpack.c.l.b16 %v1499
        %v1603 = vunpack.c.l.b16 %v1500
        %v1604 = vunpack.c.l.b16 %v1501
        %v1605 = vunpack.c.l.b16 %v1502
        %v1606 = vunpack.c.l.b16 %v1503
        %v1607 = vunpack.c.l.b16 %v1504
        %v1608 = vunpack.c.l.b16 %v1505
        %v1609 = vunpack.c.l.b16 %v1506
        %v1610 = vunpack.c.l.b16 %v1507
        %v1611 = vunpack.c.l.b16 %v1508
        %v1612 = vunpack.c.l.b16 %v1509
        %v1613 = vunpack.c.l.b16 %v1510
        %v1614 = vunpack.c.l.b16 %v1511
        %v1615 = vunpack.c.l.b16 %v1512
        %v1616 = vunpack.c.l.b16 %v1513
        %v1617 = vunpack.c.l.b16 %v1514
        %v1618 = vunpack.c.l.b16 %v1515
        %v1619 = vunpack.c.l.b16 %v1516
        %v1620 = vunpack.c.l.b16 %v1517
        %v1621 = vunpack.c.l.b16 %v1518
        %v1622 = vunpack.c.l.b16 %v1519
        %v1623 = vunpack.c.l.b16 %v1520
        %v1624 = vunpack.c.l.b16 %v1521
        %v1625 = vunpack.c.l.b16 %v1522
        %v1626 = vunpack.c.l.b16 %v1523
        %v1627 = vunpack.c.l.b16 %v1524
        %v1628 = vunpack.c.l.b16 %v1525
        %v1629 = vunpack.c.l.b16 %v1526
        %v1630 = vunpack.c.l.b16 %v1527
        %v1631 = vunpack.c.l.b16 %v1528
        %v1632 = vunpack.c.l.b16 %v1529
        %v1633 = vunpack.c.l.b16 %v1530
        %v1634 = vunpack.c.l.b16 %v1531
        %v1635 = vunpack.c.l.b16 %v1532
        %v1636 = vunpack.c.l.b16 %v1533
        %v1637 = vunpack.c.l.b16 %v1534
        %v1638 = vunpack.c.l.b16 %v1535
        %v1639 = vunpack.c.l.b16 %v1536
        %v1640 = vunpack.c.l.b16 %v1537
        %v1641 = vunpack.c.l.b16 %v1538
        %v1642 = vunpack.c.l.b16 %v1539
        %v1643 = vunpack.c.l.b16 %v1540
        %v1644 = vunpack.c.l.b16 %v1541
        %v1645 = vunpack.c.l.b16 %v1542
        %v1646 = vunpack.c.l.b16 %v1543
        %v1647 = vpack.c.b16 %v1600, %v1599
        %v1648 = vpack.c.b16 %v1602, %v1601
        %v1649 = vpack.c.b16 %v1604, %v1603
        %v1650 = vpack.c.b16 %v1606, %v1605
        %v1651 = vpack.c.b16 %v1608, %v1607
        %v1652 = vpack.c.b16 %v1610, %v1609
        %v1653 = vpack.c.b16 %v1612, %v1611
        %v1654 = vpack.c.b16 %v1614, %v1613
        %v1655 = vpack.c.b16 %v1616, %v1615
        %v1656 = vpack.c.b16 %v1618, %v1617
        %v1657 = vpack.c.b16 %v1620, %v1619
        %v1658 = vpack.c.b16 %v1622, %v1621
        %v1659 = vpack.c.b16 %v1624, %v1623
        %v1660 = vpack.c.b16 %v1626, %v1625
        %v1661 = vpack.c.b16 %v1628, %v1627
        %v1662 = vpack.c.b16 %v1630, %v1629
        %v1663 = vpack.c.b16 %v1632, %v1631
        %v1664 = vpack.c.b16 %v1634, %v1633
        %v1665 = vpack.c.b16 %v1636, %v1635
        %v1666 = vpack.c.b16 %v1638, %v1637
        %v1667 = vpack.c.b16 %v1640, %v1639
        %v1668 = vpack.c.b16 %v1642, %v1641
        %v1669 = vpack.c.b16 %v1644, %v1643
        %v1670 = vpack.c.b16 %v1646, %v1645
        %1695 = vmatprep.subr.bf16.mxu0 0
        %1696 = vmatpush1.bf16.msra.mxu0 %v1654
        %1697 = vmatprep.subr.bf16.mxu0 0
        %1698 = vmatpush1.bf16.msra.mxu0 %v1653
        %1699 = vmatprep.subr.bf16.mxu0 0
        %1700 = vmatpush1.bf16.msra.mxu0 %v1652
        %1701 = vmatprep.subr.bf16.mxu0 0
        %1702 = vmatpush1.bf16.msra.mxu0 %v1651
        %1703 = vmatprep.subr.bf16.mxu0 0
        %1704 = vmatpush1.bf16.msra.mxu0 %v1650
        %1705 = vmatprep.subr.bf16.mxu0 0
        %1706 = vmatpush1.bf16.msra.mxu0 %v1649
        %1707 = vmatprep.subr.bf16.mxu0 0
        %1708 = vmatpush1.bf16.msra.mxu0 %v1648
        %1709 = vmatprep.subr.bf16.mxu0 0
        %1710 = vmatpush1.bf16.msra.mxu0 %v1647
        %1711 = vmatprep.subr.bf16.mxu0 0
        %1712 = vmatpush2.bf16.msra.mxu0 %v1662
        %1713 = vmatprep.subr.bf16.mxu0 0
        %1714 = vmatpush2.bf16.msra.mxu0 %v1661
        %1715 = vmatprep.subr.bf16.mxu0 0
        %1716 = vmatpush2.bf16.msra.mxu0 %v1660
        %1717 = vmatprep.subr.bf16.mxu0 0
        %1718 = vmatpush2.bf16.msra.mxu0 %v1659
        %1719 = vmatprep.subr.bf16.mxu0 0
        %1720 = vmatpush2.bf16.msra.mxu0 %v1658
        %1721 = vmatprep.subr.bf16.mxu0 0
        %1722 = vmatpush2.bf16.msra.mxu0 %v1657
        %1723 = vmatprep.subr.bf16.mxu0 0
        %1724 = vmatpush2.bf16.msra.mxu0 %v1656
        %1725 = vmatprep.subr.bf16.mxu0 0
        %1726 = vmatpush2.bf16.msra.mxu0 %v1655
        %1727 = vmatprep.mubr.bf16.mxu0 %v1473
        %1728 = vmatmul.mubr.bf16.gmra.mxu0 %v1472
        %v1729 = vpop.f32.mrf.mxu0
        %v1730 = vadd.f32 %v1549, %v1729
        %v1731 = vpop.f32.mrf.mxu0
        %v1732 = vpop.f32.mrf.mxu0
        %v1733 = vadd.f32 %v1549, %v1732
        %v1734 = vpop.f32.mrf.mxu0
        %1735 = vmatprep.mubr.bf16.mxu0 %v1476
        %1736 = vmatmul.mubr.bf16.gmra.mxu0 %v1475
        %v1737 = vpop.f32.mrf.mxu0
        %v1738 = vadd.f32 %v1549, %v1737
        %v1739 = vpop.f32.mrf.mxu0
        %v1740 = vpop.f32.mrf.mxu0
        %v1741 = vadd.f32 %v1549, %v1740
        %v1742 = vpop.f32.mrf.mxu0
        %1743 = vmatprep.mubr.bf16.mxu0 %v1479
        %1744 = vmatmul.mubr.bf16.gmra.mxu0 %v1478
        %v1745 = vpop.f32.mrf.mxu0
        %v1746 = vadd.f32 %v1549, %v1745
        %v1747 = vpop.f32.mrf.mxu0
        %v1748 = vpop.f32.mrf.mxu0
        %v1749 = vadd.f32 %v1549, %v1748
        %v1750 = vpop.f32.mrf.mxu0
        %1751 = vmatprep.mubr.bf16.mxu0 %v1482
        %1752 = vmatmul.mubr.bf16.gmra.mxu0 %v1481
        %v1753 = vpop.f32.mrf.mxu0
        %v1754 = vadd.f32 %v1549, %v1753
        %v1755 = vpop.f32.mrf.mxu0
        %v1756 = vpop.f32.mrf.mxu0
        %v1757 = vadd.f32 %v1549, %v1756
        %v1758 = vpop.f32.mrf.mxu0
        %1759 = vmatprep.mubr.bf16.mxu0 %v1485
        %1760 = vmatmul.mubr.bf16.gmra.mxu0 %v1484
        %v1761 = vpop.f32.mrf.mxu0
        %v1762 = vadd.f32 %v1549, %v1761
        %v1763 = vpop.f32.mrf.mxu0
        %v1764 = vpop.f32.mrf.mxu0
        %v1765 = vadd.f32 %v1549, %v1764
        %v1766 = vpop.f32.mrf.mxu0
        %1767 = vmatprep.mubr.bf16.mxu0 %v1488
        %1768 = vmatmul.mubr.bf16.gmra.mxu0 %v1487
        %v1769 = vpop.f32.mrf.mxu0
        %v1770 = vadd.f32 %v1549, %v1769
        %v1771 = vpop.f32.mrf.mxu0
        %v1772 = vpop.f32.mrf.mxu0
        %v1773 = vadd.f32 %v1549, %v1772
        %v1774 = vpop.f32.mrf.mxu0
        %1775 = vmatprep.mubr.bf16.mxu0 %v1491
        %1776 = vmatmul.mubr.bf16.gmra.mxu0 %v1490
        %v1777 = vpop.f32.mrf.mxu0
        %v1778 = vadd.f32 %v1549, %v1777
        %v1779 = vpop.f32.mrf.mxu0
        %v1780 = vpop.f32.mrf.mxu0
        %v1781 = vadd.f32 %v1549, %v1780
        %v1782 = vpop.f32.mrf.mxu0
        %1783 = vmatprep.mubr.bf16.mxu0 %v1494
        %1784 = vmatmul.mubr.bf16.gmra.mxu0 %v1493
        %v1785 = vpop.f32.mrf.mxu0
        %v1786 = vadd.f32 %v1549, %v1785
        %v1787 = vpop.f32.mrf.mxu0
        %v1788 = vpop.f32.mrf.mxu0
        %v1789 = vadd.f32 %v1549, %v1788
        %v1790 = vpop.f32.mrf.mxu0
        %1791 = vdwg.mxu0
        %1792 = vmatprep.subr.bf16.mxu0 0
        %1793 = vmatpush1.bf16.msra.mxu0 %v1670
        %1794 = vmatprep.subr.bf16.mxu0 0
        %1795 = vmatpush1.bf16.msra.mxu0 %v1669
        %1796 = vmatprep.subr.bf16.mxu0 0
        %1797 = vmatpush1.bf16.msra.mxu0 %v1668
        %1798 = vmatprep.subr.bf16.mxu0 0
        %1799 = vmatpush1.bf16.msra.mxu0 %v1667
        %1800 = vmatprep.subr.bf16.mxu0 0
        %1801 = vmatpush1.bf16.msra.mxu0 %v1666
        %1802 = vmatprep.subr.bf16.mxu0 0
        %1803 = vmatpush1.bf16.msra.mxu0 %v1665
        %1804 = vmatprep.subr.bf16.mxu0 0
        %1805 = vmatpush1.bf16.msra.mxu0 %v1664
        %1806 = vmatprep.subr.bf16.mxu0 0
        %1807 = vmatpush1.bf16.msra.mxu0 %v1663
        %1808 = vmatprep.subr.bf16.mxu0 0
        %1809 = vmatpush2.bf16.msra.mxu0 0
        %1810 = vmatprep.subr.bf16.mxu0 0
        %1811 = vmatpush2.bf16.msra.mxu0 0
        %1812 = vmatprep.subr.bf16.mxu0 0
        %1813 = vmatpush2.bf16.msra.mxu0 0
        %1814 = vmatprep.subr.bf16.mxu0 0
        %1815 = vmatpush2.bf16.msra.mxu0 0
        %1816 = vmatprep.subr.bf16.mxu0 0
        %1817 = vmatpush2.bf16.msra.mxu0 0
        %1818 = vmatprep.subr.bf16.mxu0 0
        %1819 = vmatpush2.bf16.msra.mxu0 0
        %1820 = vmatprep.subr.bf16.mxu0 0
        %1821 = vmatpush2.bf16.msra.mxu0 0
        %1822 = vmatprep.subr.bf16.mxu0 0
        %1823 = vmatpush2.bf16.msra.mxu0 0
        %1824 = vmatprep.mubr.bf16.mxu0 0
        %1825 = vmatmul.mubr.bf16.gmra.mxu0 %v1474
        %v1826 = vpop.f32.mrf.mxu0
        %v1827 = vadd.f32 %v1730, %v1826
        %v1828 = vpop.f32.mrf.mxu0
        %v1829 = vpop.f32.mrf.mxu0
        %v1830 = vadd.f32 %v1733, %v1829
        %v1831 = vpop.f32.mrf.mxu0
        %1832 = vmatprep.mubr.bf16.mxu0 0
        %1833 = vmatmul.mubr.bf16.gmra.mxu0 %v1477
        %v1834 = vpop.f32.mrf.mxu0
        %v1835 = vadd.f32 %v1738, %v1834
        %v1836 = vpop.f32.mrf.mxu0
        %v1837 = vpop.f32.mrf.mxu0
        %v1838 = vadd.f32 %v1741, %v1837
        %v1839 = vpop.f32.mrf.mxu0
        %1840 = vmatprep.mubr.bf16.mxu0 0
        %1841 = vmatmul.mubr.bf16.gmra.mxu0 %v1480
        %v1842 = vpop.f32.mrf.mxu0
        %v1843 = vadd.f32 %v1746, %v1842
        %v1844 = vpop.f32.mrf.mxu0
        %v1845 = vpop.f32.mrf.mxu0
        %v1846 = vadd.f32 %v1749, %v1845
        %v1847 = vpop.f32.mrf.mxu0
        %1848 = vmatprep.mubr.bf16.mxu0 0
        %1849 = vmatmul.mubr.bf16.gmra.mxu0 %v1483
        %v1850 = vpop.f32.mrf.mxu0
        %v1851 = vadd.f32 %v1754, %v1850
        %v1852 = vpop.f32.mrf.mxu0
        %v1853 = vpop.f32.mrf.mxu0
        %v1854 = vadd.f32 %v1757, %v1853
        %v1855 = vpop.f32.mrf.mxu0
        %1856 = vmatprep.mubr.bf16.mxu0 0
        %1857 = vmatmul.mubr.bf16.gmra.mxu0 %v1486
        %v1858 = vpop.f32.mrf.mxu0
        %v1859 = vadd.f32 %v1762, %v1858
        %v1860 = vpop.f32.mrf.mxu0
        %v1861 = vpop.f32.mrf.mxu0
        %v1862 = vadd.f32 %v1765, %v1861
        %v1863 = vpop.f32.mrf.mxu0
        %1864 = vmatprep.mubr.bf16.mxu0 0
        %1865 = vmatmul.mubr.bf16.gmra.mxu0 %v1489
        %v1866 = vpop.f32.mrf.mxu0
        %v1867 = vadd.f32 %v1770, %v1866
        %v1868 = vpop.f32.mrf.mxu0
        %v1869 = vpop.f32.mrf.mxu0
        %v1870 = vadd.f32 %v1773, %v1869
        %v1871 = vpop.f32.mrf.mxu0
        %1872 = vmatprep.mubr.bf16.mxu0 0
        %1873 = vmatmul.mubr.bf16.gmra.mxu0 %v1492
        %v1874 = vpop.f32.mrf.mxu0
        %v1875 = vadd.f32 %v1778, %v1874
        %v1876 = vpop.f32.mrf.mxu0
        %v1877 = vpop.f32.mrf.mxu0
        %v1878 = vadd.f32 %v1781, %v1877
        %v1879 = vpop.f32.mrf.mxu0
        %1880 = vmatprep.mubr.bf16.mxu0 0
        %1881 = vmatmul.mubr.bf16.gmra.mxu0 %v1495
        %v1882 = vpop.f32.mrf.mxu0
        %v1883 = vadd.f32 %v1786, %v1882
        %v1884 = vpop.f32.mrf.mxu0
        %v1885 = vpop.f32.mrf.mxu0
        %v1886 = vadd.f32 %v1789, %v1885
        %v1887 = vpop.f32.mrf.mxu0
        %1888 = vdwg.mxu0
        %v1889 = vmax.f32 %v1827, 0.0
        %v1890 = vmax.f32 %v1830, 0.0
        %v1891 = vmax.f32 %v1835, 0.0
        %v1892 = vmax.f32 %v1838, 0.0
        %v1893 = vmax.f32 %v1843, 0.0
        %v1894 = vmax.f32 %v1846, 0.0
        %v1895 = vmax.f32 %v1851, 0.0
        %v1896 = vmax.f32 %v1854, 0.0
        %v1897 = vmax.f32 %v1859, 0.0
        %v1898 = vmax.f32 %v1862, 0.0
        %v1899 = vmax.f32 %v1867, 0.0
        %v1900 = vmax.f32 %v1870, 0.0
        %v1901 = vmax.f32 %v1875, 0.0
        %v1902 = vmax.f32 %v1878, 0.0
        %v1903 = vmax.f32 %v1883, 0.0
        %v1904 = vmax.f32 %v1886, 0.0
        %v1905 = vrot.slane %v1889, 7
        %v1906 = vrot.slane %v1890, 7
        %v1907 = vrot.slane %v1891, 7
        %v1908 = vrot.slane %v1892, 7
        %v1909 = vrot.slane %v1893, 7
        %v1910 = vrot.slane %v1894, 7
        %v1911 = vrot.slane %v1895, 7
        %v1912 = vrot.slane %v1896, 7
        %v1913 = vrot.slane %v1897, 7
        %v1914 = vrot.slane %v1898, 7
        %v1915 = vrot.slane %v1899, 7
        %v1916 = vrot.slane %v1900, 7
        %v1917 = vrot.slane %v1901, 7
        %v1918 = vrot.slane %v1902, 7
        %v1919 = vrot.slane %v1903, 7
        %v1920 = vrot.slane %v1904, 7
        %v1921 = vsel %vm861, %v1919, %v1920
        %v1922 = vsel %vm861, %v1918, %v1919
        %v1923 = vsel %vm861, %v1917, %v1918
        %v1924 = vsel %vm861, %v1916, %v1917
        %v1925 = vsel %vm861, %v1915, %v1916
        %v1926 = vsel %vm861, %v1914, %v1915
        %v1927 = vsel %vm861, %v1913, %v1914
        %v1928 = vsel %vm861, %v1912, %v1913
        %v1929 = vsel %vm861, %v1911, %v1912
        %v1930 = vsel %vm861, %v1910, %v1911
        %v1931 = vsel %vm861, %v1909, %v1910
        %v1932 = vsel %vm861, %v1908, %v1909
        %v1933 = vsel %vm861, %v1907, %v1908
        %v1934 = vsel %vm861, %v1906, %v1907
        %v1935 = vsel %vm861, %v1905, %v1906
        %v1936 = vsel %vm861, %v1920, %v1905
        %v1937 = vsel %vm813, 0.0, %v1936
        %v1938 = vsel %vm814, 0.0, %v1935
        %v1939 = vsel %vm815, 0.0, %v1934
        %v1940 = vsel %vm816, 0.0, %v1933
        %v1941 = vsel %vm817, 0.0, %v1932
        %v1942 = vsel %vm818, 0.0, %v1931
        %v1943 = vsel %vm819, 0.0, %v1930
        %v1944 = vsel %vm820, 0.0, %v1929
        %v1945 = vsel %vm821, 0.0, %v1928
        %v1946 = vsel %vm822, 0.0, %v1927
        %v1947 = vsel %vm823, 0.0, %v1926
        %v1948 = vsel %vm824, 0.0, %v1925
        %v1949 = vsel %vm825, 0.0, %v1924
        %v1950 = vsel %vm826, 0.0, %v1923
        %v1951 = vsel %vm827, 0.0, %v1922
        %v1952 = vsel %vm828, 0.0, %v1921
        %v1953 = vrot.slane %v1889, 1
        %v1954 = vrot.slane %v1890, 1
        %v1955 = vrot.slane %v1891, 1
        %v1956 = vrot.slane %v1892, 1
        %v1957 = vrot.slane %v1893, 1
        %v1958 = vrot.slane %v1894, 1
        %v1959 = vrot.slane %v1895, 1
        %v1960 = vrot.slane %v1896, 1
        %v1961 = vrot.slane %v1897, 1
        %v1962 = vrot.slane %v1898, 1
        %v1963 = vrot.slane %v1899, 1
        %v1964 = vrot.slane %v1900, 1
        %v1965 = vrot.slane %v1901, 1
        %v1966 = vrot.slane %v1902, 1
        %v1967 = vrot.slane %v1903, 1
        %v1968 = vrot.slane %v1904, 1
        %v1969 = vsel %vm910, %v1967, %v1968
        %v1970 = vsel %vm910, %v1966, %v1967
        %v1971 = vsel %vm910, %v1965, %v1966
        %v1972 = vsel %vm910, %v1964, %v1965
        %v1973 = vsel %vm910, %v1963, %v1964
        %v1974 = vsel %vm910, %v1962, %v1963
        %v1975 = vsel %vm910, %v1961, %v1962
        %v1976 = vsel %vm910, %v1960, %v1961
        %v1977 = vsel %vm910, %v1959, %v1960
        %v1978 = vsel %vm910, %v1958, %v1959
        %v1979 = vsel %vm910, %v1957, %v1958
        %v1980 = vsel %vm910, %v1956, %v1957
        %v1981 = vsel %vm910, %v1955, %v1956
        %v1982 = vsel %vm910, %v1954, %v1955
        %v1983 = vsel %vm910, %v1953, %v1954
        %v1984 = vsel %vm910, %v1968, %v1953
        %v1985 = vsel %vm829, 0.0, %v1983
        %v1986 = vsel %vm830, 0.0, %v1982
        %v1987 = vsel %vm831, 0.0, %v1981
        %v1988 = vsel %vm832, 0.0, %v1980
        %v1989 = vsel %vm833, 0.0, %v1979
        %v1990 = vsel %vm834, 0.0, %v1978
        %v1991 = vsel %vm835, 0.0, %v1977
        %v1992 = vsel %vm836, 0.0, %v1976
        %v1993 = vsel %vm837, 0.0, %v1975
        %v1994 = vsel %vm838, 0.0, %v1974
        %v1995 = vsel %vm839, 0.0, %v1973
        %v1996 = vsel %vm840, 0.0, %v1972
        %v1997 = vsel %vm841, 0.0, %v1971
        %v1998 = vsel %vm842, 0.0, %v1970
        %v1999 = vsel %vm843, 0.0, %v1969
        %v2000 = vsel %vm844, 0.0, %v1984
        %v2001 = vpack.c.bf16 %v1938, %v1937
        %v2002 = vpack.c.bf16 %v1890, %v1889
        %v2003 = vpack.c.bf16 %v1986, %v1985
        %v2004 = vpack.c.bf16 %v1940, %v1939
        %v2005 = vpack.c.bf16 %v1892, %v1891
        %v2006 = vpack.c.bf16 %v1988, %v1987
        %v2007 = vpack.c.bf16 %v1942, %v1941
        %v2008 = vpack.c.bf16 %v1894, %v1893
        %v2009 = vpack.c.bf16 %v1990, %v1989
        %v2010 = vpack.c.bf16 %v1944, %v1943
        %v2011 = vpack.c.bf16 %v1896, %v1895
        %v2012 = vpack.c.bf16 %v1992, %v1991
        %v2013 = vpack.c.bf16 %v1946, %v1945
        %v2014 = vpack.c.bf16 %v1898, %v1897
        %v2015 = vpack.c.bf16 %v1994, %v1993
        %v2016 = vpack.c.bf16 %v1948, %v1947
        %v2017 = vpack.c.bf16 %v1900, %v1899
        %v2018 = vpack.c.bf16 %v1996, %v1995
        %v2019 = vpack.c.bf16 %v1950, %v1949
        %v2020 = vpack.c.bf16 %v1902, %v1901
        %v2021 = vpack.c.bf16 %v1998, %v1997
        %v2022 = vpack.c.bf16 %v1952, %v1951
        %v2023 = vpack.c.bf16 %v1904, %v1903
        %v2024 = vpack.c.bf16 %v2000, %v1999
        %v2025 = vld [vmem:[#allocation5] sm:$0xf]
        %v2026 = vld [vmem:[#allocation5 + $0x4] sm:$0xf]
        %v2027 = vld [vmem:[#allocation5 + $0x8] sm:$0xf]
        %v2028 = vld [vmem:[#allocation5 + $0xc] sm:$0xf]
        %v2029 = vld [vmem:[#allocation5 + $0x10] sm:$0xf]
        %v2030 = vld [vmem:[#allocation5 + $0x14] sm:$0xf]
        %v2031 = vld [vmem:[#allocation5 + $0x18] sm:$0xf]
        %v2032 = vld [vmem:[#allocation5 + $0x1c] sm:$0xf]
        %v2033 = vld [vmem:[#allocation5 + $0x20] sm:$0xf]
        %v2034 = vld [vmem:[#allocation5 + $0x24] sm:$0xf]
        %v2035 = vld [vmem:[#allocation5 + $0x28] sm:$0xf]
        %v2036 = vld [vmem:[#allocation5 + $0x2c] sm:$0xf]
        %v2037 = vld [vmem:[#allocation5 + $0x30] sm:$0xf]
        %v2038 = vld [vmem:[#allocation5 + $0x34] sm:$0xf]
        %v2039 = vld [vmem:[#allocation5 + $0x38] sm:$0xf]
        %v2040 = vld [vmem:[#allocation5 + $0x3c] sm:$0xf]
        %v2041 = vld [vmem:[#allocation5 + $0x40] sm:$0xf]
        %v2042 = vld [vmem:[#allocation5 + $0x44] sm:$0xf]
        %v2043 = vld [vmem:[#allocation5 + $0x48] sm:$0xf]
        %v2044 = vld [vmem:[#allocation5 + $0x4c] sm:$0xf]
        %v2045 = vld [vmem:[#allocation5 + $0x50] sm:$0xf]
        %v2046 = vld [vmem:[#allocation5 + $0x54] sm:$0xf]
        %v2047 = vld [vmem:[#allocation5 + $0x58] sm:$0xf]
        %v2048 = vld [vmem:[#allocation5 + $0x5c] sm:$0xf]
        %v2049 = vld [vmem:[#allocation5 + $0x60] sm:$0xf]
        %v2050 = vld [vmem:[#allocation5 + $0x64] sm:$0xf]
        %v2051 = vld [vmem:[#allocation5 + $0x68] sm:$0xf]
        %v2052 = vld [vmem:[#allocation5 + $0x6c] sm:$0xf]
        %v2053 = vld [vmem:[#allocation5 + $0x70] sm:$0xf]
        %v2054 = vld [vmem:[#allocation5 + $0x74] sm:$0xf]
        %v2055 = vld [vmem:[#allocation5 + $0x78] sm:$0xf]
        %v2056 = vld [vmem:[#allocation5 + $0x7c] sm:$0xf]
        %v2057 = vld [vmem:[#allocation5 + $0x80] sm:$0xf]
        %v2058 = vld [vmem:[#allocation5 + $0x84] sm:$0xf]
        %v2059 = vld [vmem:[#allocation5 + $0x88] sm:$0xf]
        %v2060 = vld [vmem:[#allocation5 + $0x8c] sm:$0xf]
        %v2061 = vld [vmem:[#allocation5 + $0x90] sm:$0xf]
        %v2062 = vld [vmem:[#allocation5 + $0x94] sm:$0xf]
        %v2063 = vld [vmem:[#allocation5 + $0x98] sm:$0xf]
        %v2064 = vld [vmem:[#allocation5 + $0x9c] sm:$0xf]
        %v2065 = vld [vmem:[#allocation5 + $0xa0] sm:$0xf]
        %v2066 = vld [vmem:[#allocation5 + $0xa4] sm:$0xf]
        %v2067 = vld [vmem:[#allocation5 + $0xa8] sm:$0xf]
        %v2068 = vld [vmem:[#allocation5 + $0xac] sm:$0xf]
        %v2069 = vld [vmem:[#allocation5 + $0xb0] sm:$0xf]
        %v2070 = vld [vmem:[#allocation5 + $0xb4] sm:$0xf]
        %v2071 = vld [vmem:[#allocation5 + $0xb8] sm:$0xf]
        %v2072 = vld [vmem:[#allocation5 + $0xbc] sm:$0xf]
        %v2073 = vld [vmem:[%s7] sm:$0x1]
        %v2075 = vlaneseq
        %v2076 = vshrl.u32 %v2075, 7
        %v2077 = vsub.s32 0, %v2076
        %v2078 = vrot.slane %v2073, %v2077
        %v2128 = vunpack.c.l.b16 %v2025
        %v2129 = vunpack.c.l.b16 %v2026
        %v2130 = vunpack.c.l.b16 %v2027
        %v2131 = vunpack.c.l.b16 %v2028
        %v2132 = vunpack.c.l.b16 %v2029
        %v2133 = vunpack.c.l.b16 %v2030
        %v2134 = vunpack.c.l.b16 %v2031
        %v2135 = vunpack.c.l.b16 %v2032
        %v2136 = vunpack.c.l.b16 %v2033
        %v2137 = vunpack.c.l.b16 %v2034
        %v2138 = vunpack.c.l.b16 %v2035
        %v2139 = vunpack.c.l.b16 %v2036
        %v2140 = vunpack.c.l.b16 %v2037
        %v2141 = vunpack.c.l.b16 %v2038
        %v2142 = vunpack.c.l.b16 %v2039
        %v2143 = vunpack.c.l.b16 %v2040
        %v2144 = vunpack.c.l.b16 %v2041
        %v2145 = vunpack.c.l.b16 %v2042
        %v2146 = vunpack.c.l.b16 %v2043
        %v2147 = vunpack.c.l.b16 %v2044
        %v2148 = vunpack.c.l.b16 %v2045
        %v2149 = vunpack.c.l.b16 %v2046
        %v2150 = vunpack.c.l.b16 %v2047
        %v2151 = vunpack.c.l.b16 %v2048
        %v2152 = vunpack.c.l.b16 %v2049
        %v2153 = vunpack.c.l.b16 %v2050
        %v2154 = vunpack.c.l.b16 %v2051
        %v2155 = vunpack.c.l.b16 %v2052
        %v2156 = vunpack.c.l.b16 %v2053
        %v2157 = vunpack.c.l.b16 %v2054
        %v2158 = vunpack.c.l.b16 %v2055
        %v2159 = vunpack.c.l.b16 %v2056
        %v2160 = vunpack.c.l.b16 %v2057
        %v2161 = vunpack.c.l.b16 %v2058
        %v2162 = vunpack.c.l.b16 %v2059
        %v2163 = vunpack.c.l.b16 %v2060
        %v2164 = vunpack.c.l.b16 %v2061
        %v2165 = vunpack.c.l.b16 %v2062
        %v2166 = vunpack.c.l.b16 %v2063
        %v2167 = vunpack.c.l.b16 %v2064
        %v2168 = vunpack.c.l.b16 %v2065
        %v2169 = vunpack.c.l.b16 %v2066
        %v2170 = vunpack.c.l.b16 %v2067
        %v2171 = vunpack.c.l.b16 %v2068
        %v2172 = vunpack.c.l.b16 %v2069
        %v2173 = vunpack.c.l.b16 %v2070
        %v2174 = vunpack.c.l.b16 %v2071
        %v2175 = vunpack.c.l.b16 %v2072
        %v2176 = vpack.c.b16 %v2129, %v2128
        %v2177 = vpack.c.b16 %v2131, %v2130
        %v2178 = vpack.c.b16 %v2133, %v2132
        %v2179 = vpack.c.b16 %v2135, %v2134
        %v2180 = vpack.c.b16 %v2137, %v2136
        %v2181 = vpack.c.b16 %v2139, %v2138
        %v2182 = vpack.c.b16 %v2141, %v2140
        %v2183 = vpack.c.b16 %v2143, %v2142
        %v2184 = vpack.c.b16 %v2145, %v2144
        %v2185 = vpack.c.b16 %v2147, %v2146
        %v2186 = vpack.c.b16 %v2149, %v2148
        %v2187 = vpack.c.b16 %v2151, %v2150
        %v2188 = vpack.c.b16 %v2153, %v2152
        %v2189 = vpack.c.b16 %v2155, %v2154
        %v2190 = vpack.c.b16 %v2157, %v2156
        %v2191 = vpack.c.b16 %v2159, %v2158
        %v2192 = vpack.c.b16 %v2161, %v2160
        %v2193 = vpack.c.b16 %v2163, %v2162
        %v2194 = vpack.c.b16 %v2165, %v2164
        %v2195 = vpack.c.b16 %v2167, %v2166
        %v2196 = vpack.c.b16 %v2169, %v2168
        %v2197 = vpack.c.b16 %v2171, %v2170
        %v2198 = vpack.c.b16 %v2173, %v2172
        %v2199 = vpack.c.b16 %v2175, %v2174
        %2224 = vmatprep.subr.bf16.mxu0 0
        %2225 = vmatpush1.bf16.msra.mxu0 %v2183
        %2226 = vmatprep.subr.bf16.mxu0 0
        %2227 = vmatpush1.bf16.msra.mxu0 %v2182
        %2228 = vmatprep.subr.bf16.mxu0 0
        %2229 = vmatpush1.bf16.msra.mxu0 %v2181
        %2230 = vmatprep.subr.bf16.mxu0 0
        %2231 = vmatpush1.bf16.msra.mxu0 %v2180
        %2232 = vmatprep.subr.bf16.mxu0 0
        %2233 = vmatpush1.bf16.msra.mxu0 %v2179
        %2234 = vmatprep.subr.bf16.mxu0 0
        %2235 = vmatpush1.bf16.msra.mxu0 %v2178
        %2236 = vmatprep.subr.bf16.mxu0 0
        %2237 = vmatpush1.bf16.msra.mxu0 %v2177
        %2238 = vmatprep.subr.bf16.mxu0 0
        %2239 = vmatpush1.bf16.msra.mxu0 %v2176
        %2240 = vmatprep.subr.bf16.mxu0 0
        %2241 = vmatpush2.bf16.msra.mxu0 %v2191
        %2242 = vmatprep.subr.bf16.mxu0 0
        %2243 = vmatpush2.bf16.msra.mxu0 %v2190
        %2244 = vmatprep.subr.bf16.mxu0 0
        %2245 = vmatpush2.bf16.msra.mxu0 %v2189
        %2246 = vmatprep.subr.bf16.mxu0 0
        %2247 = vmatpush2.bf16.msra.mxu0 %v2188
        %2248 = vmatprep.subr.bf16.mxu0 0
        %2249 = vmatpush2.bf16.msra.mxu0 %v2187
        %2250 = vmatprep.subr.bf16.mxu0 0
        %2251 = vmatpush2.bf16.msra.mxu0 %v2186
        %2252 = vmatprep.subr.bf16.mxu0 0
        %2253 = vmatpush2.bf16.msra.mxu0 %v2185
        %2254 = vmatprep.subr.bf16.mxu0 0
        %2255 = vmatpush2.bf16.msra.mxu0 %v2184
        %2256 = vmatprep.mubr.bf16.mxu0 %v2002
        %2257 = vmatmul.mubr.bf16.gmra.mxu0 %v2001
        %v2258 = vpop.f32.mrf.mxu0
        %v2259 = vadd.f32 %v2078, %v2258
        %v2260 = vpop.f32.mrf.mxu0
        %v2261 = vpop.f32.mrf.mxu0
        %v2262 = vadd.f32 %v2078, %v2261
        %v2263 = vpop.f32.mrf.mxu0
        %2264 = vmatprep.mubr.bf16.mxu0 %v2005
        %2265 = vmatmul.mubr.bf16.gmra.mxu0 %v2004
        %v2266 = vpop.f32.mrf.mxu0
        %v2267 = vadd.f32 %v2078, %v2266
        %v2268 = vpop.f32.mrf.mxu0
        %v2269 = vpop.f32.mrf.mxu0
        %v2270 = vadd.f32 %v2078, %v2269
        %v2271 = vpop.f32.mrf.mxu0
        %2272 = vmatprep.mubr.bf16.mxu0 %v2008
        %2273 = vmatmul.mubr.bf16.gmra.mxu0 %v2007
        %v2274 = vpop.f32.mrf.mxu0
        %v2275 = vadd.f32 %v2078, %v2274
        %v2276 = vpop.f32.mrf.mxu0
        %v2277 = vpop.f32.mrf.mxu0
        %v2278 = vadd.f32 %v2078, %v2277
        %v2279 = vpop.f32.mrf.mxu0
        %2280 = vmatprep.mubr.bf16.mxu0 %v2011
        %2281 = vmatmul.mubr.bf16.gmra.mxu0 %v2010
        %v2282 = vpop.f32.mrf.mxu0
        %v2283 = vadd.f32 %v2078, %v2282
        %v2284 = vpop.f32.mrf.mxu0
        %v2285 = vpop.f32.mrf.mxu0
        %v2286 = vadd.f32 %v2078, %v2285
        %v2287 = vpop.f32.mrf.mxu0
        %2288 = vmatprep.mubr.bf16.mxu0 %v2014
        %2289 = vmatmul.mubr.bf16.gmra.mxu0 %v2013
        %v2290 = vpop.f32.mrf.mxu0
        %v2291 = vadd.f32 %v2078, %v2290
        %v2292 = vpop.f32.mrf.mxu0
        %v2293 = vpop.f32.mrf.mxu0
        %v2294 = vadd.f32 %v2078, %v2293
        %v2295 = vpop.f32.mrf.mxu0
        %2296 = vmatprep.mubr.bf16.mxu0 %v2017
        %2297 = vmatmul.mubr.bf16.gmra.mxu0 %v2016
        %v2298 = vpop.f32.mrf.mxu0
        %v2299 = vadd.f32 %v2078, %v2298
        %v2300 = vpop.f32.mrf.mxu0
        %v2301 = vpop.f32.mrf.mxu0
        %v2302 = vadd.f32 %v2078, %v2301
        %v2303 = vpop.f32.mrf.mxu0
        %2304 = vmatprep.mubr.bf16.mxu0 %v2020
        %2305 = vmatmul.mubr.bf16.gmra.mxu0 %v2019
        %v2306 = vpop.f32.mrf.mxu0
        %v2307 = vadd.f32 %v2078, %v2306
        %v2308 = vpop.f32.mrf.mxu0
        %v2309 = vpop.f32.mrf.mxu0
        %v2310 = vadd.f32 %v2078, %v2309
        %v2311 = vpop.f32.mrf.mxu0
        %2312 = vmatprep.mubr.bf16.mxu0 %v2023
        %2313 = vmatmul.mubr.bf16.gmra.mxu0 %v2022
        %v2314 = vpop.f32.mrf.mxu0
        %v2315 = vadd.f32 %v2078, %v2314
        %v2316 = vpop.f32.mrf.mxu0
        %v2317 = vpop.f32.mrf.mxu0
        %v2318 = vadd.f32 %v2078, %v2317
        %v2319 = vpop.f32.mrf.mxu0
        %2320 = vdwg.mxu0
        %2321 = vmatprep.subr.bf16.mxu0 0
        %2322 = vmatpush1.bf16.msra.mxu0 %v2199
        %2323 = vmatprep.subr.bf16.mxu0 0
        %2324 = vmatpush1.bf16.msra.mxu0 %v2198
        %2325 = vmatprep.subr.bf16.mxu0 0
        %2326 = vmatpush1.bf16.msra.mxu0 %v2197
        %2327 = vmatprep.subr.bf16.mxu0 0
        %2328 = vmatpush1.bf16.msra.mxu0 %v2196
        %2329 = vmatprep.subr.bf16.mxu0 0
        %2330 = vmatpush1.bf16.msra.mxu0 %v2195
        %2331 = vmatprep.subr.bf16.mxu0 0
        %2332 = vmatpush1.bf16.msra.mxu0 %v2194
        %2333 = vmatprep.subr.bf16.mxu0 0
        %2334 = vmatpush1.bf16.msra.mxu0 %v2193
        %2335 = vmatprep.subr.bf16.mxu0 0
        %2336 = vmatpush1.bf16.msra.mxu0 %v2192
        %2337 = vmatprep.subr.bf16.mxu0 0
        %2338 = vmatpush2.bf16.msra.mxu0 0
        %2339 = vmatprep.subr.bf16.mxu0 0
        %2340 = vmatpush2.bf16.msra.mxu0 0
        %2341 = vmatprep.subr.bf16.mxu0 0
        %2342 = vmatpush2.bf16.msra.mxu0 0
        %2343 = vmatprep.subr.bf16.mxu0 0
        %2344 = vmatpush2.bf16.msra.mxu0 0
        %2345 = vmatprep.subr.bf16.mxu0 0
        %2346 = vmatpush2.bf16.msra.mxu0 0
        %2347 = vmatprep.subr.bf16.mxu0 0
        %2348 = vmatpush2.bf16.msra.mxu0 0
        %2349 = vmatprep.subr.bf16.mxu0 0
        %2350 = vmatpush2.bf16.msra.mxu0 0
        %2351 = vmatprep.subr.bf16.mxu0 0
        %2352 = vmatpush2.bf16.msra.mxu0 0
        %2353 = vmatprep.mubr.bf16.mxu0 0
        %2354 = vmatmul.mubr.bf16.gmra.mxu0 %v2003
        %v2355 = vpop.f32.mrf.mxu0
        %v2356 = vadd.f32 %v2259, %v2355
        %v2357 = vpop.f32.mrf.mxu0
        %v2358 = vpop.f32.mrf.mxu0
        %v2359 = vadd.f32 %v2262, %v2358
        %v2360 = vpop.f32.mrf.mxu0
        %2361 = vmatprep.mubr.bf16.mxu0 0
        %2362 = vmatmul.mubr.bf16.gmra.mxu0 %v2006
        %v2363 = vpop.f32.mrf.mxu0
        %v2364 = vadd.f32 %v2267, %v2363
        %v2365 = vpop.f32.mrf.mxu0
        %v2366 = vpop.f32.mrf.mxu0
        %v2367 = vadd.f32 %v2270, %v2366
        %v2368 = vpop.f32.mrf.mxu0
        %2369 = vmatprep.mubr.bf16.mxu0 0
        %2370 = vmatmul.mubr.bf16.gmra.mxu0 %v2009
        %v2371 = vpop.f32.mrf.mxu0
        %v2372 = vadd.f32 %v2275, %v2371
        %v2373 = vpop.f32.mrf.mxu0
        %v2374 = vpop.f32.mrf.mxu0
        %v2375 = vadd.f32 %v2278, %v2374
        %v2376 = vpop.f32.mrf.mxu0
        %2377 = vmatprep.mubr.bf16.mxu0 0
        %2378 = vmatmul.mubr.bf16.gmra.mxu0 %v2012
        %v2379 = vpop.f32.mrf.mxu0
        %v2380 = vadd.f32 %v2283, %v2379
        %v2381 = vpop.f32.mrf.mxu0
        %v2382 = vpop.f32.mrf.mxu0
        %v2383 = vadd.f32 %v2286, %v2382
        %v2384 = vpop.f32.mrf.mxu0
        %2385 = vmatprep.mubr.bf16.mxu0 0
        %2386 = vmatmul.mubr.bf16.gmra.mxu0 %v2015
        %v2387 = vpop.f32.mrf.mxu0
        %v2388 = vadd.f32 %v2291, %v2387
        %v2389 = vpop.f32.mrf.mxu0
        %v2390 = vpop.f32.mrf.mxu0
        %v2391 = vadd.f32 %v2294, %v2390
        %v2392 = vpop.f32.mrf.mxu0
        %2393 = vmatprep.mubr.bf16.mxu0 0
        %2394 = vmatmul.mubr.bf16.gmra.mxu0 %v2018
        %v2395 = vpop.f32.mrf.mxu0
        %v2396 = vadd.f32 %v2299, %v2395
        %v2397 = vpop.f32.mrf.mxu0
        %v2398 = vpop.f32.mrf.mxu0
        %v2399 = vadd.f32 %v2302, %v2398
        %v2400 = vpop.f32.mrf.mxu0
        %2401 = vmatprep.mubr.bf16.mxu0 0
        %2402 = vmatmul.mubr.bf16.gmra.mxu0 %v2021
        %v2403 = vpop.f32.mrf.mxu0
        %v2404 = vadd.f32 %v2307, %v2403
        %v2405 = vpop.f32.mrf.mxu0
        %v2406 = vpop.f32.mrf.mxu0
        %v2407 = vadd.f32 %v2310, %v2406
        %v2408 = vpop.f32.mrf.mxu0
        %2409 = vmatprep.mubr.bf16.mxu0 0
        %2410 = vmatmul.mubr.bf16.gmra.mxu0 %v2024
        %v2411 = vpop.f32.mrf.mxu0
        %v2412 = vadd.f32 %v2315, %v2411
        %v2413 = vpop.f32.mrf.mxu0
        %v2414 = vpop.f32.mrf.mxu0
        %v2415 = vadd.f32 %v2318, %v2414
        %v2416 = vpop.f32.mrf.mxu0
        %2417 = vdwg.mxu0
        %v2418 = vmax.f32 %v2356, 0.0
        %v2419 = vmax.f32 %v2359, 0.0
        %v2420 = vmax.f32 %v2364, 0.0
        %v2421 = vmax.f32 %v2367, 0.0
        %v2422 = vmax.f32 %v2372, 0.0
        %v2423 = vmax.f32 %v2375, 0.0
        %v2424 = vmax.f32 %v2380, 0.0
        %v2425 = vmax.f32 %v2383, 0.0
        %v2426 = vmax.f32 %v2388, 0.0
        %v2427 = vmax.f32 %v2391, 0.0
        %v2428 = vmax.f32 %v2396, 0.0
        %v2429 = vmax.f32 %v2399, 0.0
        %v2430 = vmax.f32 %v2404, 0.0
        %v2431 = vmax.f32 %v2407, 0.0
        %v2432 = vmax.f32 %v2412, 0.0
        %v2433 = vmax.f32 %v2415, 0.0
        %v2434 = vmax.f32 %v2418, %v2419
        %v2435 = vrot.slane %v2434, 4
        %v2436 = vmax.f32 %v2434, %v2435
        %v2437 = vrot.slane %v2436, 2
        %v2438 = vmax.f32 %v2436, %v2437
        %v2439 = vrot.slane %v2438, 1
        %v2440 = vmax.f32 %v2438, %v2439
        %v2441 = vmax.f32 %v2420, %v2421
        %v2442 = vrot.slane %v2441, 4
        %v2443 = vmax.f32 %v2441, %v2442
        %v2444 = vrot.slane %v2443, 2
        %v2445 = vmax.f32 %v2443, %v2444
        %v2446 = vrot.slane %v2445, 1
        %v2447 = vmax.f32 %v2445, %v2446
        %v2448 = vmax.f32 %v2422, %v2423
        %v2449 = vrot.slane %v2448, 4
        %v2450 = vmax.f32 %v2448, %v2449
        %v2451 = vrot.slane %v2450, 2
        %v2452 = vmax.f32 %v2450, %v2451
        %v2453 = vrot.slane %v2452, 1
        %v2454 = vmax.f32 %v2452, %v2453
        %v2455 = vmax.f32 %v2424, %v2425
        %v2456 = vrot.slane %v2455, 4
        %v2457 = vmax.f32 %v2455, %v2456
        %v2458 = vrot.slane %v2457, 2
        %v2459 = vmax.f32 %v2457, %v2458
        %v2460 = vrot.slane %v2459, 1
        %v2461 = vmax.f32 %v2459, %v2460
        %v2462 = vmax.f32 %v2426, %v2427
        %v2463 = vrot.slane %v2462, 4
        %v2464 = vmax.f32 %v2462, %v2463
        %v2465 = vrot.slane %v2464, 2
        %v2466 = vmax.f32 %v2464, %v2465
        %v2467 = vrot.slane %v2466, 1
        %v2468 = vmax.f32 %v2466, %v2467
        %v2469 = vmax.f32 %v2428, %v2429
        %v2470 = vrot.slane %v2469, 4
        %v2471 = vmax.f32 %v2469, %v2470
        %v2472 = vrot.slane %v2471, 2
        %v2473 = vmax.f32 %v2471, %v2472
        %v2474 = vrot.slane %v2473, 1
        %v2475 = vmax.f32 %v2473, %v2474
        %v2476 = vmax.f32 %v2430, %v2431
        %v2477 = vrot.slane %v2476, 4
        %v2478 = vmax.f32 %v2476, %v2477
        %v2479 = vrot.slane %v2478, 2
        %v2480 = vmax.f32 %v2478, %v2479
        %v2481 = vrot.slane %v2480, 1
        %v2482 = vmax.f32 %v2480, %v2481
        %v2483 = vmax.f32 %v2432, %v2433
        %v2484 = vrot.slane %v2483, 4
        %v2485 = vmax.f32 %v2483, %v2484
        %v2486 = vrot.slane %v2485, 2
        %v2487 = vmax.f32 %v2485, %v2486
        %v2488 = vrot.slane %v2487, 1
        %v2489 = vmax.f32 %v2487, %v2488
        %vm2498 = vcmask 1041409
        %v2499 = vsel %vm2498, %v2447, %v2440
        %vm2500 = vcmask 1042434
        %v2501 = vsel %vm2500, %v2454, %v2499
        %vm2502 = vcmask 1043459
        %v2503 = vsel %vm2502, %v2461, %v2501
        %vm2504 = vcmask 1044484
        %v2505 = vsel %vm2504, %v2468, %v2503
        %vm2506 = vcmask 1045509
        %v2507 = vsel %vm2506, %v2475, %v2505
        %vm2508 = vcmask 1046534
        %v2509 = vsel %vm2508, %v2482, %v2507
        %vm2510 = vcmask 1047559
        %v2511 = vsel %vm2510, %v2489, %v2509
        %2513 = vst [vmem:[%s329] sm:$0xff] %v2511
        %s2514 = sand.u32 %s205, 1
        %s2515 = scalar_lea.sflag [#allocation4], %s2514
        %s2516 = sand.u32 %s205, 1
        %s2517 = smul.addr %s2516, 8
        %s2518 = scalar_lea.vmem [#allocation7], %s2517
        // Predicated region
        $region61: #{tpu_custom_call.1} parent=51 // pred_check
          %p2519 = pneg %p215
        $region62: #{tpu_custom_call.1} parent=51 // pred_check_branch
          %2521 = sbr.rel (%p2519) target = $region64
        $region63: #{tpu_custom_call.1} parent=51 // pred_region
          %s2523 = ssub.s32 128, 128
          %2524 = vsyncadd %s2515, %s2523
          %s2525 = smul.addr %s24, 128
          %s2526 = scalar_lea.hbm %s8, %s2525
          %s2528 = sshll.u32 %s2518, 4
          %s2529 = int_to_ptr.vmem [resolvable:$true] %s2528
          %2531 = dma.vmem_to_hbm [thread:$0]  %s2529, 128, %s2526, %s2515
        $region64: #{tpu_custom_call.1} parent=51 // pred_fallthru
          _
      $region52: #{tpu_custom_call.1} parent=5 // pred_fallthru
        _
      %p2532 = scmp.le.s32.totalorder 2, %s19
      // Predicated region
      $region65: #{tpu_custom_call.1} parent=5 // pred_check
        %p2533 = pneg %p2532
      $region66: #{tpu_custom_call.1} parent=5 // pred_check_branch
        %2535 = sbr.rel (%p2533) target = $region68
      $region67: #{tpu_custom_call.1} parent=5 // pred_region
        %s2536 = ssub.s32 %s19, 2
        // Predicated region
        $region69: #{tpu_custom_call.1} parent=67 // pred_check
          %p2537 = pneg %p221
        $region70: #{tpu_custom_call.1} parent=67 // pred_check_branch
          %2539 = sbr.rel (%p2537) target = $region72
        $region71: #{tpu_custom_call.1} parent=67 // pred_region
          %s2540 = sand.u32 %s206, 1
          %s2541 = scalar_lea.sflag [#allocation4], %s2540
          %s2542 = sand.u32 %s206, 1
          %s2543 = smul.addr %s2542, 8
          %s2544 = scalar_lea.vmem [#allocation7], %s2543
          %2545 = dma.done %s2541, 128
        $region72: #{tpu_custom_call.1} parent=67 // pred_fallthru
          _
      $region68: #{tpu_custom_call.1} parent=5 // pred_fallthru
        _
    $region6: #{tpu_custom_call.1} parent=1 // loop_footer
      %s23 = sadd.s32 1, %s19
    $region7: #{tpu_custom_call.1} parent=1 // loop_footer_branch
      %18 = sbr.rel target = $region3
    $region8: #{tpu_custom_call.1} parent=1 // loop_exit
      _
    %2546 = vsyncpa [#allocation3], 1
    %s2547 = scalar_lea.sflag [#allocation3], 1
    %2548 = vsyncpa %s2547, 1
    %2549 = vsyncpa [#allocation6], 1
    %2550 = vsyncpa [#allocation4], 1
    %s2551 = scalar_lea.sflag [#allocation4], 1
    %2552 = vsyncpa %s2551, 1

</llo_original>
